<compile_context>
chip_gen: v7x
topology: tpu7x:2x2x1
jax: 0.10.0
libtpu: 0.0.40
codegen_flags: <defaults>
</compile_context>

<pallas_src>
import functools

import numpy as np

import jax
import jax.numpy as jnp
from jax.experimental import pallas as pl
from jax.experimental.pallas import tpu as pltpu

BN_EPS = 1e-5
EXPANSION = 4


# ------------------------------ Pallas kernel ------------------------------ #

def _bottleneck_kernel(x_ref, w1_ref, s1_ref, b1_ref,
                       w2_ref, s2_ref, b2_ref,
                       w3_ref, s3_ref, b3_ref,
                       *rest, H, W, stride, planes, has_downsample):
    rest = list(rest)
    p_ref = rest.pop(0) if stride > 1 else None
    if has_downsample:
        wd_ref, sd_ref, bd_ref = rest.pop(0), rest.pop(0), rest.pop(0)
    out_ref = rest.pop(0)

    s = stride
    HW = H * W
    C = planes
    B = x_ref.shape[0]          # images per grid step
    bf16 = jnp.bfloat16
    f32 = jnp.float32

    # Hoisted weight loads / constants (used by every image in the block).
    w1 = w1_ref[...]; w2 = w2_ref[...]; w3 = w3_ref[...]
    s1 = s1_ref[...]; b1 = b1_ref[...]
    s2 = s2_ref[...]; b2 = b2_ref[...]
    s3 = s3_ref[...]; b3 = b3_ref[...]
    if s > 1:
        pool_mat = p_ref[...]                                   # (HW, Ho*Wo) bf16
    if has_downsample:
        wd = wd_ref[...]; sd = sd_ref[...]; bd = bd_ref[...]

    # Column (pixel) masks for the +/-1 W-shifts of the 3x3 conv.  Pixel index
    # p = h*W + w lives in the lane dimension; kw=0 taps read w-1 (invalid at
    # w==0), kw=2 taps read w+1 (invalid at w==W-1).  Hoisted out of the image
    # loop (broadcasts are not CSE'd).
    col = jax.lax.broadcasted_iota(jnp.int32, (1, HW), 1)
    wcol = col % W
    mask_l = (wcol >= 1).astype(bf16)
    mask_r = (wcol <= W - 2).astype(bf16)
    zpad = jnp.zeros((C, W + 1), bf16)

    for b in range(B):                      # small, unrolled batch-block loop
        x_b = x_ref[b]                      # (Cin, HW) f32
        x_bf = x_b.astype(bf16)

        # ---------------- conv1 (1x1) + bn1 + relu ---------------- #
        a1 = jnp.dot(w1, x_bf, preferred_element_type=f32)      # (C, HW)
        h1 = jnp.maximum(a1 * s1 + b1, 0.0).astype(bf16)

        # ---- conv2 (3x3, pad=1) + bn2 + relu: one (C,9C)x(9C,HW) matmul ---- #
        # Zero-extend h1 along the lane/pixel axis so every h-out-of-range tap
        # reads zeros; w-out-of-range taps are killed by the masks above.
        hp = jnp.concatenate([zpad, h1, zpad], axis=1)          # (C, HW + 2W + 2)
        taps = []
        for kh in range(3):
            for kw in range(3):
                off = kh * W + kw            # == (kh-1)*W + (kw-1) + (W+1)
                t = hp[:, off:off + HW]
                if kw == 0:
                    t = t * mask_l
                elif kw == 2:
                    t = t * mask_r
                taps.append(t)
        slab = jnp.concatenate(taps, axis=0)                    # (9C, HW) bf16
        a2 = jnp.dot(w2, slab, preferred_element_type=f32)      # (C, HW)
        h2 = jnp.maximum(a2 * s2 + b2, 0.0)

        # ---------------- avg pool (kernel = stride = s) ---------------- #
        # Pooling as an MXU matmul against the tiny resident P matrix:
        # no strided loads, no scratch round-trip.
        if s > 1:
            pooled = jnp.dot(h2.astype(bf16), pool_mat,
                             preferred_element_type=f32)        # (C, Ho*Wo)
        else:
            pooled = h2

        # ---------------- conv3 (1x1) + bn3 ---------------- #
        a3 = jnp.dot(w3, pooled.astype(bf16), preferred_element_type=f32)
        out = a3 * s3 + b3                                       # (4C, Ho*Wo)

        # ---------------- identity / downsample branch ---------------- #
        if has_downsample:
            if s > 1:
                px = jnp.dot(x_bf, pool_mat,
                             preferred_element_type=f32).astype(bf16)
            else:
                px = x_bf
            ad = jnp.dot(wd, px, preferred_element_type=f32)
            identity = ad * sd + bd
        else:
            identity = x_b                                       # f32, same shape

        out_ref[b] = jnp.maximum(out + identity, 0.0).astype(out_ref.dtype)


# ------------------------------- Wrapper ----------------------------------- #

def _pool_matrix(H, W, s):
    """(H*W, Ho*Wo) average-pool matrix, built once on host (static shapes)."""
    Ho, Wo = H // s, W // s
    hw = np.arange(H * W)
    h, w = hw // W, hw % W
    P = np.zeros((H * W, Ho * Wo), np.float32)
    P[hw, (h // s) * Wo + (w // s)] = 1.0 / (s * s)
    return jnp.asarray(P, dtype=jnp.bfloat16)


def bottleneck_forward(x_nchw, params, stride, planes, batch_block=None):
    N, Cin, H, W = x_nchw.shape
    s = int(stride)
    assert s >= 1 and H % s == 0 and W % s == 0, "AvgPool window must divide H, W"
    Ho, Wo = H // s, W // s
    HW, HoWo = H * W, Ho * Wo
    Cout = planes * EXPANSION
    has_ds = "wd" in params
    if not has_ds:
        assert s == 1 and Cin == Cout

    # Batch several images per grid step to amortize per-step pipeline overhead.
    # Budget ~8 MiB for double-buffered x/out blocks so the block also fits the
    # smaller v7x VMEM.  (On v7x an even grid length keeps both TCs busy; tune
    # `batch_block` explicitly if that matters more than fewer, fatter steps.)
    if batch_block is None:
        per_img = (Cin * HW + Cout * HoWo) * 4 * 2
        batch_block = max(1, min(N, (8 << 20) // max(per_img, 1)))
        while N % batch_block:
            batch_block -= 1
    B = int(batch_block)
    assert N % B == 0
    grid = (N // B,)

    # Free reshape only: stays NCHW / f32, the bf16 cast happens in-kernel.
    x3 = x_nchw.reshape(N, Cin, HW)

    in_specs = [pl.BlockSpec((B, Cin, HW), lambda n: (n, 0, 0))]
    args = [x3]

    def add_const(a):
        in_specs.append(pl.BlockSpec(a.shape, lambda n, nd=a.ndim: (0,) * nd))
        args.append(a)

    for name in ("w1", "s1", "b1", "w2", "s2", "b2", "w3", "s3", "b3"):
        add_const(params[name])
    if s > 1:
        add_const(_pool_matrix(H, W, s))
    if has_ds:
        for name in ("wd", "sd", "bd"):
            add_const(params[name])

    kern = functools.partial(_bottleneck_kernel, H=H, W=W, stride=s,
                             planes=planes, has_downsample=has_ds)

    flops_per_img = (2 * planes * Cin * HW                 # conv1
                     + 2 * planes * 9 * planes * HW        # conv2
                     + 2 * Cout * planes * HoWo)           # conv3
    if s > 1:
        flops_per_img += 2 * HW * HoWo * planes            # pool h2
    if has_ds:
        flops_per_img += 2 * Cout * Cin * HoWo
        if s > 1:
            flops_per_img += 2 * HW * HoWo * Cin
    flops = N * flops_per_img
    bytes_accessed = (N * Cin * HW * 4 + N * Cout * HoWo * 4
                      + sum(int(a.size) * a.dtype.itemsize for a in args[1:]))

    out = pl.pallas_call(
        kern,
        out_shape=jax.ShapeDtypeStruct((N, Cout, HoWo), jnp.float32),
        grid=grid,
        in_specs=in_specs,
        out_specs=pl.BlockSpec((B, Cout, HoWo), lambda n: (n, 0, 0)),
        compiler_params=pltpu.CompilerParams(
            dimension_semantics=("parallel",),
            vmem_limit_bytes=32 * 1024 * 1024),
        cost_estimate=pl.CostEstimate(flops=int(flops), transcendentals=0,
                                      bytes_accessed=int(bytes_accessed)),
    )(*args)

    return out.reshape(N, Cout, Ho, Wo)


# ------------------------------ Parameters --------------------------------- #

def init_params(key, inplanes, planes, stride):
    Cout = planes * EXPANSION
    keys = jax.random.split(key, 8)

    def bn_params(k, c):
        k1, k2, k3, k4 = jax.random.split(k, 4)
        gamma = jax.random.uniform(k1, (c,), minval=0.5, maxval=1.5)
        beta = jax.random.normal(k2, (c,)) * 0.1
        mean = jax.random.normal(k3, (c,)) * 0.1
        var = jax.random.uniform(k4, (c,), minval=0.5, maxval=1.5)
        scale = gamma / jnp.sqrt(var + BN_EPS)
        bias = beta - mean * scale
        return (scale.reshape(c, 1).astype(jnp.float32),
                bias.reshape(c, 1).astype(jnp.float32))

    p = {}
    # conv1: torch (planes, inplanes, 1, 1) -> (planes, inplanes) bf16
    p["w1"] = (jax.random.normal(keys[0], (planes, inplanes)) * 0.2).astype(jnp.bfloat16)
    p["s1"], p["b1"] = bn_params(keys[1], planes)
    # conv2: torch (planes, planes, 3, 3) -> (planes, 9*planes); column = (kh*3+kw)*planes + cin
    w2 = jax.random.normal(keys[2], (planes, planes, 3, 3)) * 0.1
    p["w2"] = jnp.transpose(w2, (0, 2, 3, 1)).reshape(planes, 9 * planes).astype(jnp.bfloat16)
    p["s2"], p["b2"] = bn_params(keys[3], planes)
    # conv3: torch (4*planes, planes, 1, 1) -> (4*planes, planes)
    p["w3"] = (jax.random.normal(keys[4], (Cout, planes)) * 0.2).astype(jnp.bfloat16)
    p["s3"], p["b3"] = bn_params(keys[5], Cout)
    if stride > 1 or inplanes != Cout:
        p["wd"] = (jax.random.normal(keys[6], (Cout, inplanes)) * 0.2).astype(jnp.bfloat16)
        p["sd"], p["bd"] = bn_params(keys[7], Cout)
    return p


# ------------------------------- Reference ---------------------------------- #

def reference_forward(x, params, stride, planes):
    """Pure-JAX (XLA) reference mirroring the kernel's bf16-matmul rounding."""
    N, Cin, H, W = x.shape
    s = int(stride)
    Cout = planes * EXPANSION
    f32 = jnp.float32

    def bf(t):
        return t.astype(jnp.bfloat16).astype(f32)

    def rs(v):  # (c, 1) BN scale/bias -> broadcast over (N, c, H, W)
        return v.reshape(1, -1, 1, 1)

    xb = bf(x)

    a1 = jnp.einsum("oc,nchw->nohw", params["w1"].astype(f32), xb)
    h1 = jnp.maximum(a1 * rs(params["s1"]) + rs(params["b1"]), 0.0)
    h1b = bf(h1)

    hp = jnp.pad(h1b, ((0, 0), (0, 0), (1, 1), (1, 1)))
    w2 = params["w2"].astype(f32).reshape(planes, 3, 3, planes)   # (o, kh, kw, ci)
    acc = jnp.zeros((N, planes, H, W), f32)
    for kh in range(3):
        for kw in range(3):
            acc = acc + jnp.einsum("oc,nchw->nohw", w2[:, kh, kw, :],
                                   hp[:, :, kh:kh + H, kw:kw + W])
    h2 = jnp.maximum(acc * rs(params["s2"]) + rs(params["b2"]), 0.0)

    def pool(t):
        if s == 1:
            return t
        n, c, hh, ww = t.shape
        return t.reshape(n, c, hh // s, s, ww // s, s).mean(axis=(3, 5))

    p2 = bf(pool(bf(h2)))
    o = (jnp.einsum("oc,nchw->nohw", params["w3"].astype(f32), p2)
         * rs(params["s3"]) + rs(params["b3"]))
    if "wd" in params:
        px = bf(pool(xb))
        idn = (jnp.einsum("oc,nchw->nohw", params["wd"].astype(f32), px)
               * rs(params["sd"]) + rs(params["bd"]))
    else:
        idn = x.astype(f32)
    return jnp.maximum(o + idn, 0.0)


# ---------------------------------- Main ------------------------------------ #

if __name__ == "__main__":
    key = jax.random.PRNGKey(0)

    configs = [
        # (N, inplanes, planes, H, W, stride)
        (2, 64, 32, 16, 16, 2),    # downsample path (stride 2, channel change)
        (2, 128, 32, 16, 16, 1),   # identity path (stride 1, inplanes == 4*planes)
    ]
    for (N, inplanes, planes, H, W, stride) in configs:
        key, kx, kp = jax.random.split(key, 3)
        x = jax.random.normal(kx, (N, inplanes, H, W), dtype=jnp.float32)
        params = init_params(kp, inplanes, planes, stride)

        out = jax.block_until_ready(bottleneck_forward(x, params, stride, planes))
        assert out.shape == (N, planes * EXPANSION, H // stride, W // stride), out.shape

        ref = reference_forward(x, params, stride, planes)
        max_err = float(jnp.max(jnp.abs(out - ref)))
        assert jnp.allclose(out, ref, atol=2e-2, rtol=2e-2), \
            f"max abs err {max_err} for config {(N, inplanes, planes, H, W, stride)}"

    print("KERNEL_OK")
</pallas_src>

<mosaic_0001>
module attributes {stable_mosaic.version = 11 : i64} {
  func.func @_bottleneck_kernel(%arg0: i32, %arg1: memref<2x64x256xf32, #tpu.memory_space<vmem>>, %arg2: memref<32x64xbf16, #tpu.memory_space<vmem>>, %arg3: memref<32x1xf32, #tpu.memory_space<vmem>>, %arg4: memref<32x1xf32, #tpu.memory_space<vmem>>, %arg5: memref<32x288xbf16, #tpu.memory_space<vmem>>, %arg6: memref<32x1xf32, #tpu.memory_space<vmem>>, %arg7: memref<32x1xf32, #tpu.memory_space<vmem>>, %arg8: memref<128x32xbf16, #tpu.memory_space<vmem>>, %arg9: memref<128x1xf32, #tpu.memory_space<vmem>>, %arg10: memref<128x1xf32, #tpu.memory_space<vmem>>, %arg11: memref<256x64xbf16, #tpu.memory_space<vmem>>, %arg12: memref<128x64xbf16, #tpu.memory_space<vmem>>, %arg13: memref<128x1xf32, #tpu.memory_space<vmem>>, %arg14: memref<128x1xf32, #tpu.memory_space<vmem>>, %arg15: memref<2x128x64xf32, #tpu.memory_space<vmem>>) attributes {dimension_semantics = [#tpu.dimension_semantics<parallel>], iteration_bounds = array<i64: 1>, scalar_prefetch = 0 : i64, scratch_operands = 0 : i64, tpu.core_type = #tpu.core_type<tc>, window_params = [{transform_indices = @transform_0, window_bounds = array<i64: 2, 64, 256>}, {pipeline_mode = #tpu.pipeline_mode<synchronous>, transform_indices = @transform_1, window_bounds = array<i64: 32, 64>}, {pipeline_mode = #tpu.pipeline_mode<synchronous>, transform_indices = @transform_2, window_bounds = array<i64: 32, 1>}, {pipeline_mode = #tpu.pipeline_mode<synchronous>, transform_indices = @transform_3, window_bounds = array<i64: 32, 1>}, {pipeline_mode = #tpu.pipeline_mode<synchronous>, transform_indices = @transform_4, window_bounds = array<i64: 32, 288>}, {pipeline_mode = #tpu.pipeline_mode<synchronous>, transform_indices = @transform_5, window_bounds = array<i64: 32, 1>}, {pipeline_mode = #tpu.pipeline_mode<synchronous>, transform_indices = @transform_6, window_bounds = array<i64: 32, 1>}, {pipeline_mode = #tpu.pipeline_mode<synchronous>, transform_indices = @transform_7, window_bounds = array<i64: 128, 32>}, {pipeline_mode = #tpu.pipeline_mode<synchronous>, transform_indices = @transform_8, window_bounds = array<i64: 128, 1>}, {pipeline_mode = #tpu.pipeline_mode<synchronous>, transform_indices = @transform_9, window_bounds = array<i64: 128, 1>}, {pipeline_mode = #tpu.pipeline_mode<synchronous>, transform_indices = @transform_10, window_bounds = array<i64: 256, 64>}, {pipeline_mode = #tpu.pipeline_mode<synchronous>, transform_indices = @transform_11, window_bounds = array<i64: 128, 64>}, {pipeline_mode = #tpu.pipeline_mode<synchronous>, transform_indices = @transform_12, window_bounds = array<i64: 128, 1>}, {pipeline_mode = #tpu.pipeline_mode<synchronous>, transform_indices = @transform_13, window_bounds = array<i64: 128, 1>}, {transform_indices = @transform_14, window_bounds = array<i64: 2, 128, 64>}]} {
    %c0 = arith.constant 0 : index
    %c0_0 = arith.constant 0 : index
    %0 = vector.load %arg2[%c0, %c0_0] : memref<32x64xbf16, #tpu.memory_space<vmem>>, vector<32x64xbf16>
    %c0_1 = arith.constant 0 : index
    %c0_2 = arith.constant 0 : index
    %1 = vector.load %arg5[%c0_1, %c0_2] : memref<32x288xbf16, #tpu.memory_space<vmem>>, vector<32x288xbf16>
    %c0_3 = arith.constant 0 : index
    %c0_4 = arith.constant 0 : index
    %2 = vector.load %arg8[%c0_3, %c0_4] : memref<128x32xbf16, #tpu.memory_space<vmem>>, vector<128x32xbf16>
    %c0_5 = arith.constant 0 : index
    %c0_6 = arith.constant 0 : index
    %3 = vector.load %arg3[%c0_5, %c0_6] : memref<32x1xf32, #tpu.memory_space<vmem>>, vector<32x1xf32>
    %c0_7 = arith.constant 0 : index
    %c0_8 = arith.constant 0 : index
    %4 = vector.load %arg4[%c0_7, %c0_8] : memref<32x1xf32, #tpu.memory_space<vmem>>, vector<32x1xf32>
    %c0_9 = arith.constant 0 : index
    %c0_10 = arith.constant 0 : index
    %5 = vector.load %arg6[%c0_9, %c0_10] : memref<32x1xf32, #tpu.memory_space<vmem>>, vector<32x1xf32>
    %c0_11 = arith.constant 0 : index
    %c0_12 = arith.constant 0 : index
    %6 = vector.load %arg7[%c0_11, %c0_12] : memref<32x1xf32, #tpu.memory_space<vmem>>, vector<32x1xf32>
    %c0_13 = arith.constant 0 : index
    %c0_14 = arith.constant 0 : index
    %7 = vector.load %arg9[%c0_13, %c0_14] : memref<128x1xf32, #tpu.memory_space<vmem>>, vector<128x1xf32>
    %c0_15 = arith.constant 0 : index
    %c0_16 = arith.constant 0 : index
    %8 = vector.load %arg10[%c0_15, %c0_16] : memref<128x1xf32, #tpu.memory_space<vmem>>, vector<128x1xf32>
    %c0_17 = arith.constant 0 : index
    %c0_18 = arith.constant 0 : index
    %9 = vector.load %arg11[%c0_17, %c0_18] : memref<256x64xbf16, #tpu.memory_space<vmem>>, vector<256x64xbf16>
    %c0_19 = arith.constant 0 : index
    %c0_20 = arith.constant 0 : index
    %10 = vector.load %arg12[%c0_19, %c0_20] : memref<128x64xbf16, #tpu.memory_space<vmem>>, vector<128x64xbf16>
    %c0_21 = arith.constant 0 : index
    %c0_22 = arith.constant 0 : index
    %11 = vector.load %arg13[%c0_21, %c0_22] : memref<128x1xf32, #tpu.memory_space<vmem>>, vector<128x1xf32>
    %c0_23 = arith.constant 0 : index
    %c0_24 = arith.constant 0 : index
    %12 = vector.load %arg14[%c0_23, %c0_24] : memref<128x1xf32, #tpu.memory_space<vmem>>, vector<128x1xf32>
    %13 = tpu.iota {dimensions = array<i32: 1>} : vector<1x256xi32>
    %c16_i32 = arith.constant 16 : i32
    %c0_i32 = arith.constant 0 : i32
    %14 = arith.cmpi eq, %c16_i32, %c0_i32 : i32
    %c1_i32 = arith.constant 1 : i32
    %15 = arith.select %14, %c1_i32, %c16_i32 : i32
    %16 = vector.broadcast %15 : i32 to vector<1x256xi32>
    %17 = arith.remsi %13, %16 : vector<1x256xi32>
    %c0_i32_25 = arith.constant 0 : i32
    %18 = vector.broadcast %c0_i32_25 : i32 to vector<1x256xi32>
    %19 = arith.cmpi ne, %17, %18 : vector<1x256xi32>
    %c0_i32_26 = arith.constant 0 : i32
    %20 = vector.broadcast %c0_i32_26 : i32 to vector<1x256xi32>
    %21 = arith.cmpi slt, %17, %20 : vector<1x256xi32>
    %c0_i32_27 = arith.constant 0 : i32
    %22 = arith.cmpi slt, %15, %c0_i32_27 : i32
    %23 = vector.broadcast %22 : i1 to vector<1x256xi1>
    %24 = vector.broadcast %23 : vector<1x256xi1> to vector<1x256xi1>
    %25 = arith.xori %21, %24 : vector<1x256xi1>
    %26 = arith.andi %25, %19 : vector<1x256xi1>
    %27 = vector.broadcast %15 : i32 to vector<1x256xi32>
    %28 = arith.addi %17, %27 : vector<1x256xi32>
    %29 = arith.select %26, %28, %17 : vector<1x256xi1>, vector<1x256xi32>
    %c1_i32_28 = arith.constant 1 : i32
    %30 = vector.broadcast %c1_i32_28 : i32 to vector<1x256xi32>
    %31 = arith.cmpi sge, %29, %30 : vector<1x256xi32>
    %32 = arith.extui %31 : vector<1x256xi1> to vector<1x256xi32>
    %33 = arith.sitofp %32 : vector<1x256xi32> to vector<1x256xf32>
    %34 = arith.truncf %33 : vector<1x256xf32> to vector<1x256xbf16>
    %c14_i32 = arith.constant 14 : i32
    %35 = vector.broadcast %c14_i32 : i32 to vector<1x256xi32>
    %36 = arith.cmpi sle, %29, %35 : vector<1x256xi32>
    %37 = arith.extui %36 : vector<1x256xi1> to vector<1x256xi32>
    %38 = arith.sitofp %37 : vector<1x256xi32> to vector<1x256xf32>
    %39 = arith.truncf %38 : vector<1x256xf32> to vector<1x256xbf16>
    %cst = arith.constant 0.000000e+00 : bf16
    %40 = vector.broadcast %cst : bf16 to vector<32x17xbf16>
    %c0_29 = arith.constant 0 : index
    %c0_30 = arith.constant 0 : index
    %c0_31 = arith.constant 0 : index
    %41 = vector.load %arg1[%c0_29, %c0_30, %c0_31] : memref<2x64x256xf32, #tpu.memory_space<vmem>>, vector<1x64x256xf32>
    %42 = vector.shape_cast %41 : vector<1x64x256xf32> to vector<64x256xf32>
    %43 = arith.truncf %42 : vector<64x256xf32> to vector<64x256xbf16>
    %cst_32 = arith.constant dense<0.000000e+00> : vector<32x256xf32>
    %44 = tpu.matmul %0, %43, %cst_32 {dimension_numbers = #tpu.dot_dimension_numbers<[1], [0], [0], [1], [0, 0, 1, 1], [], []>} : vector<32x64xbf16>, vector<64x256xbf16>, vector<32x256xf32> -> vector<32x256xf32>
    %45 = vector.broadcast %3 : vector<32x1xf32> to vector<32x256xf32>
    %46 = arith.mulf %44, %45 : vector<32x256xf32>
    %47 = vector.broadcast %4 : vector<32x1xf32> to vector<32x256xf32>
    %48 = arith.addf %46, %47 : vector<32x256xf32>
    %cst_33 = arith.constant 0.000000e+00 : f32
    %49 = vector.broadcast %cst_33 : f32 to vector<32x256xf32>
    %50 = arith.maximumf %48, %49 : vector<32x256xf32>
    %51 = arith.truncf %50 : vector<32x256xf32> to vector<32x256xbf16>
    %52 = tpu.concatenate %40, %51, %40 in 1 : vector<32x17xbf16>, vector<32x256xbf16>, vector<32x17xbf16> -> vector<32x290xbf16>
    %53 = vector.extract_strided_slice %52 {offsets = [0, 0], sizes = [32, 256], strides = [1, 1]} : vector<32x290xbf16> to vector<32x256xbf16>
    %54 = vector.broadcast %34 : vector<1x256xbf16> to vector<32x256xbf16>
    %55 = arith.mulf %53, %54 : vector<32x256xbf16>
    %56 = vector.extract_strided_slice %52 {offsets = [0, 1], sizes = [32, 256], strides = [1, 1]} : vector<32x290xbf16> to vector<32x256xbf16>
    %57 = vector.extract_strided_slice %52 {offsets = [0, 2], sizes = [32, 256], strides = [1, 1]} : vector<32x290xbf16> to vector<32x256xbf16>
    %58 = vector.broadcast %39 : vector<1x256xbf16> to vector<32x256xbf16>
    %59 = arith.mulf %57, %58 : vector<32x256xbf16>
    %60 = vector.extract_strided_slice %52 {offsets = [0, 16], sizes = [32, 256], strides = [1, 1]} : vector<32x290xbf16> to vector<32x256xbf16>
    %61 = vector.broadcast %34 : vector<1x256xbf16> to vector<32x256xbf16>
    %62 = arith.mulf %60, %61 : vector<32x256xbf16>
    %63 = vector.extract_strided_slice %52 {offsets = [0, 17], sizes = [32, 256], strides = [1, 1]} : vector<32x290xbf16> to vector<32x256xbf16>
    %64 = vector.extract_strided_slice %52 {offsets = [0, 18], sizes = [32, 256], strides = [1, 1]} : vector<32x290xbf16> to vector<32x256xbf16>
    %65 = vector.broadcast %39 : vector<1x256xbf16> to vector<32x256xbf16>
    %66 = arith.mulf %64, %65 : vector<32x256xbf16>
    %67 = vector.extract_strided_slice %52 {offsets = [0, 32], sizes = [32, 256], strides = [1, 1]} : vector<32x290xbf16> to vector<32x256xbf16>
    %68 = vector.broadcast %34 : vector<1x256xbf16> to vector<32x256xbf16>
    %69 = arith.mulf %67, %68 : vector<32x256xbf16>
    %70 = vector.extract_strided_slice %52 {offsets = [0, 33], sizes = [32, 256], strides = [1, 1]} : vector<32x290xbf16> to vector<32x256xbf16>
    %71 = vector.extract_strided_slice %52 {offsets = [0, 34], sizes = [32, 256], strides = [1, 1]} : vector<32x290xbf16> to vector<32x256xbf16>
    %72 = vector.broadcast %39 : vector<1x256xbf16> to vector<32x256xbf16>
    %73 = arith.mulf %71, %72 : vector<32x256xbf16>
    %74 = tpu.concatenate %55, %56, %59, %62, %63, %66, %69, %70, %73 in 0 : vector<32x256xbf16>, vector<32x256xbf16>, vector<32x256xbf16>, vector<32x256xbf16>, vector<32x256xbf16>, vector<32x256xbf16>, vector<32x256xbf16>, vector<32x256xbf16>, vector<32x256xbf16> -> vector<288x256xbf16>
    %cst_34 = arith.constant dense<0.000000e+00> : vector<32x256xf32>
    %75 = tpu.matmul %1, %74, %cst_34 {dimension_numbers = #tpu.dot_dimension_numbers<[1], [0], [0], [1], [0, 0, 1, 1], [], []>} : vector<32x288xbf16>, vector<288x256xbf16>, vector<32x256xf32> -> vector<32x256xf32>
    %76 = vector.broadcast %5 : vector<32x1xf32> to vector<32x256xf32>
    %77 = arith.mulf %75, %76 : vector<32x256xf32>
    %78 = vector.broadcast %6 : vector<32x1xf32> to vector<32x256xf32>
    %79 = arith.addf %77, %78 : vector<32x256xf32>
    %cst_35 = arith.constant 0.000000e+00 : f32
    %80 = vector.broadcast %cst_35 : f32 to vector<32x256xf32>
    %81 = arith.maximumf %79, %80 : vector<32x256xf32>
    %82 = arith.truncf %81 : vector<32x256xf32> to vector<32x256xbf16>
    %cst_36 = arith.constant dense<0.000000e+00> : vector<32x64xf32>
    %83 = tpu.matmul %82, %9, %cst_36 {dimension_numbers = #tpu.dot_dimension_numbers<[1], [0], [0], [1], [0, 0, 1, 1], [], []>} : vector<32x256xbf16>, vector<256x64xbf16>, vector<32x64xf32> -> vector<32x64xf32>
    %84 = arith.truncf %83 : vector<32x64xf32> to vector<32x64xbf16>
    %cst_37 = arith.constant dense<0.000000e+00> : vector<128x64xf32>
    %85 = tpu.matmul %2, %84, %cst_37 {dimension_numbers = #tpu.dot_dimension_numbers<[1], [0], [0], [1], [0, 0, 1, 1], [], []>} : vector<128x32xbf16>, vector<32x64xbf16>, vector<128x64xf32> -> vector<128x64xf32>
    %86 = vector.broadcast %7 : vector<128x1xf32> to vector<128x64xf32>
    %87 = arith.mulf %85, %86 : vector<128x64xf32>
    %88 = vector.broadcast %8 : vector<128x1xf32> to vector<128x64xf32>
    %89 = arith.addf %87, %88 : vector<128x64xf32>
    %cst_38 = arith.constant dense<0.000000e+00> : vector<64x64xf32>
    %90 = tpu.matmul %43, %9, %cst_38 {dimension_numbers = #tpu.dot_dimension_numbers<[1], [0], [0], [1], [0, 0, 1, 1], [], []>} : vector<64x256xbf16>, vector<256x64xbf16>, vector<64x64xf32> -> vector<64x64xf32>
    %91 = arith.truncf %90 : vector<64x64xf32> to vector<64x64xbf16>
    %cst_39 = arith.constant dense<0.000000e+00> : vector<128x64xf32>
    %92 = tpu.matmul %10, %91, %cst_39 {dimension_numbers = #tpu.dot_dimension_numbers<[1], [0], [0], [1], [0, 0, 1, 1], [], []>} : vector<128x64xbf16>, vector<64x64xbf16>, vector<128x64xf32> -> vector<128x64xf32>
    %93 = vector.broadcast %11 : vector<128x1xf32> to vector<128x64xf32>
    %94 = arith.mulf %92, %93 : vector<128x64xf32>
    %95 = vector.broadcast %12 : vector<128x1xf32> to vector<128x64xf32>
    %96 = arith.addf %94, %95 : vector<128x64xf32>
    %97 = arith.addf %89, %96 : vector<128x64xf32>
    %cst_40 = arith.constant 0.000000e+00 : f32
    %98 = vector.broadcast %cst_40 : f32 to vector<128x64xf32>
    %99 = arith.maximumf %97, %98 : vector<128x64xf32>
    %c0_41 = arith.constant 0 : index
    %c0_42 = arith.constant 0 : index
    %c0_43 = arith.constant 0 : index
    %100 = vector.load %arg15[%c0_41, %c0_42, %c0_43] : memref<2x128x64xf32, #tpu.memory_space<vmem>>, vector<1x128x64xf32>
    %101 = vector.shape_cast %100 : vector<1x128x64xf32> to vector<128x64xf32>
    %102 = vector.shape_cast %99 : vector<128x64xf32> to vector<1x128x64xf32>
    tpu.vector_store %arg15[%c0_41, %c0_42, %c0_43], %102 {strides = array<i32>} : memref<2x128x64xf32, #tpu.memory_space<vmem>>, vector<1x128x64xf32>,
    %c1 = arith.constant 1 : index
    %c0_44 = arith.constant 0 : index
    %c0_45 = arith.constant 0 : index
    %103 = vector.load %arg1[%c1, %c0_44, %c0_45] : memref<2x64x256xf32, #tpu.memory_space<vmem>>, vector<1x64x256xf32>
    %104 = vector.shape_cast %103 : vector<1x64x256xf32> to vector<64x256xf32>
    %105 = arith.truncf %104 : vector<64x256xf32> to vector<64x256xbf16>
    %cst_46 = arith.constant dense<0.000000e+00> : vector<32x256xf32>
    %106 = tpu.matmul %0, %105, %cst_46 {dimension_numbers = #tpu.dot_dimension_numbers<[1], [0], [0], [1], [0, 0, 1, 1], [], []>} : vector<32x64xbf16>, vector<64x256xbf16>, vector<32x256xf32> -> vector<32x256xf32>
    %107 = vector.broadcast %3 : vector<32x1xf32> to vector<32x256xf32>
    %108 = arith.mulf %106, %107 : vector<32x256xf32>
    %109 = vector.broadcast %4 : vector<32x1xf32> to vector<32x256xf32>
    %110 = arith.addf %108, %109 : vector<32x256xf32>
    %cst_47 = arith.constant 0.000000e+00 : f32
    %111 = vector.broadcast %cst_47 : f32 to vector<32x256xf32>
    %112 = arith.maximumf %110, %111 : vector<32x256xf32>
    %113 = arith.truncf %112 : vector<32x256xf32> to vector<32x256xbf16>
    %114 = tpu.concatenate %40, %113, %40 in 1 : vector<32x17xbf16>, vector<32x256xbf16>, vector<32x17xbf16> -> vector<32x290xbf16>
    %115 = vector.extract_strided_slice %114 {offsets = [0, 0], sizes = [32, 256], strides = [1, 1]} : vector<32x290xbf16> to vector<32x256xbf16>
    %116 = vector.broadcast %34 : vector<1x256xbf16> to vector<32x256xbf16>
    %117 = arith.mulf %115, %116 : vector<32x256xbf16>
    %118 = vector.extract_strided_slice %114 {offsets = [0, 1], sizes = [32, 256], strides = [1, 1]} : vector<32x290xbf16> to vector<32x256xbf16>
    %119 = vector.extract_strided_slice %114 {offsets = [0, 2], sizes = [32, 256], strides = [1, 1]} : vector<32x290xbf16> to vector<32x256xbf16>
    %120 = vector.broadcast %39 : vector<1x256xbf16> to vector<32x256xbf16>
    %121 = arith.mulf %119, %120 : vector<32x256xbf16>
    %122 = vector.extract_strided_slice %114 {offsets = [0, 16], sizes = [32, 256], strides = [1, 1]} : vector<32x290xbf16> to vector<32x256xbf16>
    %123 = vector.broadcast %34 : vector<1x256xbf16> to vector<32x256xbf16>
    %124 = arith.mulf %122, %123 : vector<32x256xbf16>
    %125 = vector.extract_strided_slice %114 {offsets = [0, 17], sizes = [32, 256], strides = [1, 1]} : vector<32x290xbf16> to vector<32x256xbf16>
    %126 = vector.extract_strided_slice %114 {offsets = [0, 18], sizes = [32, 256], strides = [1, 1]} : vector<32x290xbf16> to vector<32x256xbf16>
    %127 = vector.broadcast %39 : vector<1x256xbf16> to vector<32x256xbf16>
    %128 = arith.mulf %126, %127 : vector<32x256xbf16>
    %129 = vector.extract_strided_slice %114 {offsets = [0, 32], sizes = [32, 256], strides = [1, 1]} : vector<32x290xbf16> to vector<32x256xbf16>
    %130 = vector.broadcast %34 : vector<1x256xbf16> to vector<32x256xbf16>
    %131 = arith.mulf %129, %130 : vector<32x256xbf16>
    %132 = vector.extract_strided_slice %114 {offsets = [0, 33], sizes = [32, 256], strides = [1, 1]} : vector<32x290xbf16> to vector<32x256xbf16>
    %133 = vector.extract_strided_slice %114 {offsets = [0, 34], sizes = [32, 256], strides = [1, 1]} : vector<32x290xbf16> to vector<32x256xbf16>
    %134 = vector.broadcast %39 : vector<1x256xbf16> to vector<32x256xbf16>
    %135 = arith.mulf %133, %134 : vector<32x256xbf16>
    %136 = tpu.concatenate %117, %118, %121, %124, %125, %128, %131, %132, %135 in 0 : vector<32x256xbf16>, vector<32x256xbf16>, vector<32x256xbf16>, vector<32x256xbf16>, vector<32x256xbf16>, vector<32x256xbf16>, vector<32x256xbf16>, vector<32x256xbf16>, vector<32x256xbf16> -> vector<288x256xbf16>
    %cst_48 = arith.constant dense<0.000000e+00> : vector<32x256xf32>
    %137 = tpu.matmul %1, %136, %cst_48 {dimension_numbers = #tpu.dot_dimension_numbers<[1], [0], [0], [1], [0, 0, 1, 1], [], []>} : vector<32x288xbf16>, vector<288x256xbf16>, vector<32x256xf32> -> vector<32x256xf32>
    %138 = vector.broadcast %5 : vector<32x1xf32> to vector<32x256xf32>
    %139 = arith.mulf %137, %138 : vector<32x256xf32>
    %140 = vector.broadcast %6 : vector<32x1xf32> to vector<32x256xf32>
    %141 = arith.addf %139, %140 : vector<32x256xf32>
    %cst_49 = arith.constant 0.000000e+00 : f32
    %142 = vector.broadcast %cst_49 : f32 to vector<32x256xf32>
    %143 = arith.maximumf %141, %142 : vector<32x256xf32>
    %144 = arith.truncf %143 : vector<32x256xf32> to vector<32x256xbf16>
    %cst_50 = arith.constant dense<0.000000e+00> : vector<32x64xf32>
    %145 = tpu.matmul %144, %9, %cst_50 {dimension_numbers = #tpu.dot_dimension_numbers<[1], [0], [0], [1], [0, 0, 1, 1], [], []>} : vector<32x256xbf16>, vector<256x64xbf16>, vector<32x64xf32> -> vector<32x64xf32>
    %146 = arith.truncf %145 : vector<32x64xf32> to vector<32x64xbf16>
    %cst_51 = arith.constant dense<0.000000e+00> : vector<128x64xf32>
    %147 = tpu.matmul %2, %146, %cst_51 {dimension_numbers = #tpu.dot_dimension_numbers<[1], [0], [0], [1], [0, 0, 1, 1], [], []>} : vector<128x32xbf16>, vector<32x64xbf16>, vector<128x64xf32> -> vector<128x64xf32>
    %148 = vector.broadcast %7 : vector<128x1xf32> to vector<128x64xf32>
    %149 = arith.mulf %147, %148 : vector<128x64xf32>
    %150 = vector.broadcast %8 : vector<128x1xf32> to vector<128x64xf32>
    %151 = arith.addf %149, %150 : vector<128x64xf32>
    %cst_52 = arith.constant dense<0.000000e+00> : vector<64x64xf32>
    %152 = tpu.matmul %105, %9, %cst_52 {dimension_numbers = #tpu.dot_dimension_numbers<[1], [0], [0], [1], [0, 0, 1, 1], [], []>} : vector<64x256xbf16>, vector<256x64xbf16>, vector<64x64xf32> -> vector<64x64xf32>
    %153 = arith.truncf %152 : vector<64x64xf32> to vector<64x64xbf16>
    %cst_53 = arith.constant dense<0.000000e+00> : vector<128x64xf32>
    %154 = tpu.matmul %10, %153, %cst_53 {dimension_numbers = #tpu.dot_dimension_numbers<[1], [0], [0], [1], [0, 0, 1, 1], [], []>} : vector<128x64xbf16>, vector<64x64xbf16>, vector<128x64xf32> -> vector<128x64xf32>
    %155 = vector.broadcast %11 : vector<128x1xf32> to vector<128x64xf32>
    %156 = arith.mulf %154, %155 : vector<128x64xf32>
    %157 = vector.broadcast %12 : vector<128x1xf32> to vector<128x64xf32>
    %158 = arith.addf %156, %157 : vector<128x64xf32>
    %159 = arith.addf %151, %158 : vector<128x64xf32>
    %cst_54 = arith.constant 0.000000e+00 : f32
    %160 = vector.broadcast %cst_54 : f32 to vector<128x64xf32>
    %161 = arith.maximumf %159, %160 : vector<128x64xf32>
    %c1_55 = arith.constant 1 : index
    %c0_56 = arith.constant 0 : index
    %c0_57 = arith.constant 0 : index
    %162 = vector.load %arg15[%c1_55, %c0_56, %c0_57] : memref<2x128x64xf32, #tpu.memory_space<vmem>>, vector<1x128x64xf32>
    %163 = vector.shape_cast %162 : vector<1x128x64xf32> to vector<128x64xf32>
    %164 = vector.shape_cast %161 : vector<128x64xf32> to vector<1x128x64xf32>
    tpu.vector_store %arg15[%c1_55, %c0_56, %c0_57], %164 {strides = array<i32>} : memref<2x128x64xf32, #tpu.memory_space<vmem>>, vector<1x128x64xf32>,
    return
  }
  func.func @transform_0(%arg0: i32) -> (i32, i32, i32) {
    %c0_i32 = arith.constant 0 : i32
    %c0_i32_0 = arith.constant 0 : i32
    %c0_i32_1 = arith.constant 0 : i32
    return %arg0, %c0_i32, %c0_i32_0 : i32, i32, i32
  }
  func.func @transform_1(%arg0: i32) -> (i32, i32) {
    %c0_i32 = arith.constant 0 : i32
    %c0_i32_0 = arith.constant 0 : i32
    %c0_i32_1 = arith.constant 0 : i32
    return %c0_i32, %c0_i32_0 : i32, i32
  }
  func.func @transform_2(%arg0: i32) -> (i32, i32) {
    %c0_i32 = arith.constant 0 : i32
    %c0_i32_0 = arith.constant 0 : i32
    %c0_i32_1 = arith.constant 0 : i32
    return %c0_i32, %c0_i32_0 : i32, i32
  }
  func.func @transform_3(%arg0: i32) -> (i32, i32) {
    %c0_i32 = arith.constant 0 : i32
    %c0_i32_0 = arith.constant 0 : i32
    %c0_i32_1 = arith.constant 0 : i32
    return %c0_i32, %c0_i32_0 : i32, i32
  }
  func.func @transform_4(%arg0: i32) -> (i32, i32) {
    %c0_i32 = arith.constant 0 : i32
    %c0_i32_0 = arith.constant 0 : i32
    %c0_i32_1 = arith.constant 0 : i32
    return %c0_i32, %c0_i32_0 : i32, i32
  }
  func.func @transform_5(%arg0: i32) -> (i32, i32) {
    %c0_i32 = arith.constant 0 : i32
    %c0_i32_0 = arith.constant 0 : i32
    %c0_i32_1 = arith.constant 0 : i32
    return %c0_i32, %c0_i32_0 : i32, i32
  }
  func.func @transform_6(%arg0: i32) -> (i32, i32) {
    %c0_i32 = arith.constant 0 : i32
    %c0_i32_0 = arith.constant 0 : i32
    %c0_i32_1 = arith.constant 0 : i32
    return %c0_i32, %c0_i32_0 : i32, i32
  }
  func.func @transform_7(%arg0: i32) -> (i32, i32) {
    %c0_i32 = arith.constant 0 : i32
    %c0_i32_0 = arith.constant 0 : i32
    %c0_i32_1 = arith.constant 0 : i32
    return %c0_i32, %c0_i32_0 : i32, i32
  }
  func.func @transform_8(%arg0: i32) -> (i32, i32) {
    %c0_i32 = arith.constant 0 : i32
    %c0_i32_0 = arith.constant 0 : i32
    %c0_i32_1 = arith.constant 0 : i32
    return %c0_i32, %c0_i32_0 : i32, i32
  }
  func.func @transform_9(%arg0: i32) -> (i32, i32) {
    %c0_i32 = arith.constant 0 : i32
    %c0_i32_0 = arith.constant 0 : i32
    %c0_i32_1 = arith.constant 0 : i32
    return %c0_i32, %c0_i32_0 : i32, i32
  }
  func.func @transform_10(%arg0: i32) -> (i32, i32) {
    %c0_i32 = arith.constant 0 : i32
    %c0_i32_0 = arith.constant 0 : i32
    %c0_i32_1 = arith.constant 0 : i32
    return %c0_i32, %c0_i32_0 : i32, i32
  }
  func.func @transform_11(%arg0: i32) -> (i32, i32) {
    %c0_i32 = arith.constant 0 : i32
    %c0_i32_0 = arith.constant 0 : i32
    %c0_i32_1 = arith.constant 0 : i32
    return %c0_i32, %c0_i32_0 : i32, i32
  }
  func.func @transform_12(%arg0: i32) -> (i32, i32) {
    %c0_i32 = arith.constant 0 : i32
    %c0_i32_0 = arith.constant 0 : i32
    %c0_i32_1 = arith.constant 0 : i32
    return %c0_i32, %c0_i32_0 : i32, i32
  }
  func.func @transform_13(%arg0: i32) -> (i32, i32) {
    %c0_i32 = arith.constant 0 : i32
    %c0_i32_0 = arith.constant 0 : i32
    %c0_i32_1 = arith.constant 0 : i32
    return %c0_i32, %c0_i32_0 : i32, i32
  }
  func.func @transform_14(%arg0: i32) -> (i32, i32, i32) {
    %c0_i32 = arith.constant 0 : i32
    %c0_i32_0 = arith.constant 0 : i32
    %c0_i32_1 = arith.constant 0 : i32
    return %arg0, %c0_i32, %c0_i32_0 : i32, i32, i32
  }
}

</mosaic_0001>

<llo_original>
// kernel: tpu_custom_call.1
$region0: #{tpu_custom_call.1}
  #allocation0 [shape = 'u32[]', space=smem, size = 0x4, offset = 0x4, fixed_abs, tag = 'smem constant byte address 0x4 - core index']
  #allocation1 [shape = 'u32[144,128]{1,0:T(1,128)}', space=vmem, size = 0x12000, scoped, tag = 'internal scratch']
  %s0 = inlined_call_operand.vmem [shape: f32[2,64,256], index: 0, kind: input, shape index: {}]
  %s1 = inlined_call_operand.vmem [shape: bf16[32,64], index: 1, kind: input, shape index: {}]
  %s2 = inlined_call_operand.vmem [shape: f32[32,1], index: 2, kind: input, shape index: {}]
  %s3 = inlined_call_operand.vmem [shape: f32[32,1], index: 3, kind: input, shape index: {}]
  %s4 = inlined_call_operand.vmem [shape: bf16[32,288], index: 4, kind: input, shape index: {}]
  %s5 = inlined_call_operand.vmem [shape: f32[32,1], index: 5, kind: input, shape index: {}]
  %s6 = inlined_call_operand.vmem [shape: f32[32,1], index: 6, kind: input, shape index: {}]
  %s7 = inlined_call_operand.vmem [shape: bf16[128,32], index: 7, kind: input, shape index: {}]
  %s8 = inlined_call_operand.vmem [shape: f32[128,1], index: 8, kind: input, shape index: {}]
  %s9 = inlined_call_operand.vmem [shape: f32[128,1], index: 9, kind: input, shape index: {}]
  %s10 = inlined_call_operand.vmem [shape: bf16[256,64], index: 10, kind: input, shape index: {}]
  %s11 = inlined_call_operand.vmem [shape: bf16[128,64], index: 11, kind: input, shape index: {}]
  %s12 = inlined_call_operand.vmem [shape: f32[128,1], index: 12, kind: input, shape index: {}]
  %s13 = inlined_call_operand.vmem [shape: f32[128,1], index: 13, kind: input, shape index: {}]
  %s14 = inlined_call_operand.vmem [shape: f32[2,128,64], index: 14, kind: output, shape index: {}]
  %s15 = sld [smem:[#allocation0]]
  $region66: #{tpu_custom_call.1} parent=0
    _
  %s17 = ssub.s32 1, %s15
  %s18 = scalar_select 0, %s17, %s15
  // Predicated region
  $region2: #{tpu_custom_call.1} parent=0 // pred_check
    _
  $region3: #{tpu_custom_call.1} parent=0 // pred_check_branch
    %20 = sbr.rel (0) target = $region5
  $region4: #{tpu_custom_call.1} parent=0 // pred_region
    _
  $region5: #{tpu_custom_call.1} parent=0 // pred_fallthru
    _
  // Predicated region
  $region6: #{tpu_custom_call.1} parent=0 // pred_check
    _
  $region7: #{tpu_custom_call.1} parent=0 // pred_check_branch
    %22 = sbr.rel (0) target = $region9
  $region8: #{tpu_custom_call.1} parent=0 // pred_region
    _
  $region9: #{tpu_custom_call.1} parent=0 // pred_fallthru
    _
  // Predicated region
  $region10: #{tpu_custom_call.1} parent=0 // pred_check
    _
  $region11: #{tpu_custom_call.1} parent=0 // pred_check_branch
    %24 = sbr.rel (0) target = $region13
  $region12: #{tpu_custom_call.1} parent=0 // pred_region
    _
  $region13: #{tpu_custom_call.1} parent=0 // pred_fallthru
    _
  // Predicated region
  $region14: #{tpu_custom_call.1} parent=0 // pred_check
    _
  $region15: #{tpu_custom_call.1} parent=0 // pred_check_branch
    %26 = sbr.rel (0) target = $region17
  $region16: #{tpu_custom_call.1} parent=0 // pred_region
    _
  $region17: #{tpu_custom_call.1} parent=0 // pred_fallthru
    _
  // Predicated region
  $region18: #{tpu_custom_call.1} parent=0 // pred_check
    _
  $region19: #{tpu_custom_call.1} parent=0 // pred_check_branch
    %28 = sbr.rel (0) target = $region21
  $region20: #{tpu_custom_call.1} parent=0 // pred_region
    _
  $region21: #{tpu_custom_call.1} parent=0 // pred_fallthru
    _
  // Predicated region
  $region22: #{tpu_custom_call.1} parent=0 // pred_check
    _
  $region23: #{tpu_custom_call.1} parent=0 // pred_check_branch
    %30 = sbr.rel (0) target = $region25
  $region24: #{tpu_custom_call.1} parent=0 // pred_region
    _
  $region25: #{tpu_custom_call.1} parent=0 // pred_fallthru
    _
  // Predicated region
  $region26: #{tpu_custom_call.1} parent=0 // pred_check
    _
  $region27: #{tpu_custom_call.1} parent=0 // pred_check_branch
    %32 = sbr.rel (0) target = $region29
  $region28: #{tpu_custom_call.1} parent=0 // pred_region
    _
  $region29: #{tpu_custom_call.1} parent=0 // pred_fallthru
    _
  // Predicated region
  $region30: #{tpu_custom_call.1} parent=0 // pred_check
    _
  $region31: #{tpu_custom_call.1} parent=0 // pred_check_branch
    %34 = sbr.rel (0) target = $region33
  $region32: #{tpu_custom_call.1} parent=0 // pred_region
    _
  $region33: #{tpu_custom_call.1} parent=0 // pred_fallthru
    _
  // Predicated region
  $region34: #{tpu_custom_call.1} parent=0 // pred_check
    _
  $region35: #{tpu_custom_call.1} parent=0 // pred_check_branch
    %36 = sbr.rel (0) target = $region37
  $region36: #{tpu_custom_call.1} parent=0 // pred_region
    _
  $region37: #{tpu_custom_call.1} parent=0 // pred_fallthru
    _
  // Predicated region
  $region38: #{tpu_custom_call.1} parent=0 // pred_check
    _
  $region39: #{tpu_custom_call.1} parent=0 // pred_check_branch
    %38 = sbr.rel (0) target = $region41
  $region40: #{tpu_custom_call.1} parent=0 // pred_region
    _
  $region41: #{tpu_custom_call.1} parent=0 // pred_fallthru
    _
  // Predicated region
  $region42: #{tpu_custom_call.1} parent=0 // pred_check
    _
  $region43: #{tpu_custom_call.1} parent=0 // pred_check_branch
    %40 = sbr.rel (0) target = $region45
  $region44: #{tpu_custom_call.1} parent=0 // pred_region
    _
  $region45: #{tpu_custom_call.1} parent=0 // pred_fallthru
    _
  // Predicated region
  $region46: #{tpu_custom_call.1} parent=0 // pred_check
    _
  $region47: #{tpu_custom_call.1} parent=0 // pred_check_branch
    %42 = sbr.rel (0) target = $region49
  $region48: #{tpu_custom_call.1} parent=0 // pred_region
    _
  $region49: #{tpu_custom_call.1} parent=0 // pred_fallthru
    _
  // Predicated region
  $region50: #{tpu_custom_call.1} parent=0 // pred_check
    _
  $region51: #{tpu_custom_call.1} parent=0 // pred_check_branch
    %44 = sbr.rel (0) target = $region53
  $region52: #{tpu_custom_call.1} parent=0 // pred_region
    _
  $region53: #{tpu_custom_call.1} parent=0 // pred_fallthru
    _
  // Predicated region
  $region54: #{tpu_custom_call.1} parent=0 // pred_check
    _
  $region55: #{tpu_custom_call.1} parent=0 // pred_check_branch
    %46 = sbr.rel (0) target = $region57
  $region56: #{tpu_custom_call.1} parent=0 // pred_region
    _
  $region57: #{tpu_custom_call.1} parent=0 // pred_fallthru
    _
  %v48 = vld [vmem:[%s1] sm:$0xf]
  %v49 = vld [vmem:[%s1 + $0x4] sm:$0xf]
  %v50 = vld [vmem:[%s1 + $0x8] sm:$0xf]
  %v51 = vld [vmem:[%s1 + $0xc] sm:$0xf]
  %v52 = vld [vmem:[%s4] sm:$0xff]
  %v53 = vld [vmem:[%s4 + $0x8] sm:$0xf]
  %v54 = vld [vmem:[%s4 + $0xc] sm:$0xff]
  %v55 = vld [vmem:[%s4 + $0x14] sm:$0xf]
  %v56 = vld [vmem:[%s4 + $0x18] sm:$0xff]
  %v57 = vld [vmem:[%s4 + $0x20] sm:$0xf]
  %v58 = vld [vmem:[%s4 + $0x24] sm:$0xff]
  %v59 = vld [vmem:[%s4 + $0x2c] sm:$0xf]
  %v60 = vld [vmem:[%s7] sm:$0xf]
  %v61 = vld [vmem:[%s7 + $0x4] sm:$0xf]
  %v62 = vld [vmem:[%s7 + $0x8] sm:$0xf]
  %v63 = vld [vmem:[%s7 + $0xc] sm:$0xf]
  %v64 = vld [vmem:[%s7 + $0x10] sm:$0xf]
  %v65 = vld [vmem:[%s7 + $0x14] sm:$0xf]
  %v66 = vld [vmem:[%s7 + $0x18] sm:$0xf]
  %v67 = vld [vmem:[%s7 + $0x1c] sm:$0xf]
  %v68 = vld [vmem:[%s7 + $0x20] sm:$0xf]
  %v69 = vld [vmem:[%s7 + $0x24] sm:$0xf]
  %v70 = vld [vmem:[%s7 + $0x28] sm:$0xf]
  %v71 = vld [vmem:[%s7 + $0x2c] sm:$0xf]
  %v72 = vld [vmem:[%s7 + $0x30] sm:$0xf]
  %v73 = vld [vmem:[%s7 + $0x34] sm:$0xf]
  %v74 = vld [vmem:[%s7 + $0x38] sm:$0xf]
  %v75 = vld [vmem:[%s7 + $0x3c] sm:$0xf]
  %v76 = vld [vmem:[%s2] sm:$0xff]
  %v77 = vld [vmem:[%s2 + $0x8] sm:$0xff]
  %v78 = vld [vmem:[%s2 + $0x10] sm:$0xff]
  %v79 = vld [vmem:[%s2 + $0x18] sm:$0xff]
  %v80 = vld [vmem:[%s3] sm:$0xff]
  %v81 = vld [vmem:[%s3 + $0x8] sm:$0xff]
  %v82 = vld [vmem:[%s3 + $0x10] sm:$0xff]
  %v83 = vld [vmem:[%s3 + $0x18] sm:$0xff]
  %v84 = vld [vmem:[%s5] sm:$0xff]
  %v85 = vld [vmem:[%s5 + $0x8] sm:$0xff]
  %v86 = vld [vmem:[%s5 + $0x10] sm:$0xff]
  %v87 = vld [vmem:[%s5 + $0x18] sm:$0xff]
  %v88 = vld [vmem:[%s6] sm:$0xff]
  %v89 = vld [vmem:[%s6 + $0x8] sm:$0xff]
  %v90 = vld [vmem:[%s6 + $0x10] sm:$0xff]
  %v91 = vld [vmem:[%s6 + $0x18] sm:$0xff]
  %v92 = vld [vmem:[%s8] sm:$0xff]
  %v93 = vld [vmem:[%s8 + $0x8] sm:$0xff]
  %v94 = vld [vmem:[%s8 + $0x10] sm:$0xff]
  %v95 = vld [vmem:[%s8 + $0x18] sm:$0xff]
  %v96 = vld [vmem:[%s8 + $0x20] sm:$0xff]
  %v97 = vld [vmem:[%s8 + $0x28] sm:$0xff]
  %v98 = vld [vmem:[%s8 + $0x30] sm:$0xff]
  %v99 = vld [vmem:[%s8 + $0x38] sm:$0xff]
  %v100 = vld [vmem:[%s8 + $0x40] sm:$0xff]
  %v101 = vld [vmem:[%s8 + $0x48] sm:$0xff]
  %v102 = vld [vmem:[%s8 + $0x50] sm:$0xff]
  %v103 = vld [vmem:[%s8 + $0x58] sm:$0xff]
  %v104 = vld [vmem:[%s8 + $0x60] sm:$0xff]
  %v105 = vld [vmem:[%s8 + $0x68] sm:$0xff]
  %v106 = vld [vmem:[%s8 + $0x70] sm:$0xff]
  %v107 = vld [vmem:[%s8 + $0x78] sm:$0xff]
  %v108 = vld [vmem:[%s9] sm:$0xff]
  %v109 = vld [vmem:[%s9 + $0x8] sm:$0xff]
  %v110 = vld [vmem:[%s9 + $0x10] sm:$0xff]
  %v111 = vld [vmem:[%s9 + $0x18] sm:$0xff]
  %v112 = vld [vmem:[%s9 + $0x20] sm:$0xff]
  %v113 = vld [vmem:[%s9 + $0x28] sm:$0xff]
  %v114 = vld [vmem:[%s9 + $0x30] sm:$0xff]
  %v115 = vld [vmem:[%s9 + $0x38] sm:$0xff]
  %v116 = vld [vmem:[%s9 + $0x40] sm:$0xff]
  %v117 = vld [vmem:[%s9 + $0x48] sm:$0xff]
  %v118 = vld [vmem:[%s9 + $0x50] sm:$0xff]
  %v119 = vld [vmem:[%s9 + $0x58] sm:$0xff]
  %v120 = vld [vmem:[%s9 + $0x60] sm:$0xff]
  %v121 = vld [vmem:[%s9 + $0x68] sm:$0xff]
  %v122 = vld [vmem:[%s9 + $0x70] sm:$0xff]
  %v123 = vld [vmem:[%s9 + $0x78] sm:$0xff]
  %v124 = vld [vmem:[%s10] sm:$0xf]
  %v125 = vld [vmem:[%s10 + $0x4] sm:$0xf]
  %v126 = vld [vmem:[%s10 + $0x8] sm:$0xf]
  %v127 = vld [vmem:[%s10 + $0xc] sm:$0xf]
  %v128 = vld [vmem:[%s10 + $0x10] sm:$0xf]
  %v129 = vld [vmem:[%s10 + $0x14] sm:$0xf]
  %v130 = vld [vmem:[%s10 + $0x18] sm:$0xf]
  %v131 = vld [vmem:[%s10 + $0x1c] sm:$0xf]
  %v132 = vld [vmem:[%s10 + $0x20] sm:$0xf]
  %v133 = vld [vmem:[%s10 + $0x24] sm:$0xf]
  %v134 = vld [vmem:[%s10 + $0x28] sm:$0xf]
  %v135 = vld [vmem:[%s10 + $0x2c] sm:$0xf]
  %v136 = vld [vmem:[%s10 + $0x30] sm:$0xf]
  %v137 = vld [vmem:[%s10 + $0x34] sm:$0xf]
  %v138 = vld [vmem:[%s10 + $0x38] sm:$0xf]
  %v139 = vld [vmem:[%s10 + $0x3c] sm:$0xf]
  %v140 = vld [vmem:[%s10 + $0x40] sm:$0xf]
  %v141 = vld [vmem:[%s10 + $0x44] sm:$0xf]
  %v142 = vld [vmem:[%s10 + $0x48] sm:$0xf]
  %v143 = vld [vmem:[%s10 + $0x4c] sm:$0xf]
  %v144 = vld [vmem:[%s10 + $0x50] sm:$0xf]
  %v145 = vld [vmem:[%s10 + $0x54] sm:$0xf]
  %v146 = vld [vmem:[%s10 + $0x58] sm:$0xf]
  %v147 = vld [vmem:[%s10 + $0x5c] sm:$0xf]
  %v148 = vld [vmem:[%s10 + $0x60] sm:$0xf]
  %v149 = vld [vmem:[%s10 + $0x64] sm:$0xf]
  %v150 = vld [vmem:[%s10 + $0x68] sm:$0xf]
  %v151 = vld [vmem:[%s10 + $0x6c] sm:$0xf]
  %v152 = vld [vmem:[%s10 + $0x70] sm:$0xf]
  %v153 = vld [vmem:[%s10 + $0x74] sm:$0xf]
  %v154 = vld [vmem:[%s10 + $0x78] sm:$0xf]
  %v155 = vld [vmem:[%s10 + $0x7c] sm:$0xf]
  %v156 = vld [vmem:[%s11] sm:$0xf]
  %v157 = vld [vmem:[%s11 + $0x4] sm:$0xf]
  %v158 = vld [vmem:[%s11 + $0x8] sm:$0xf]
  %v159 = vld [vmem:[%s11 + $0xc] sm:$0xf]
  %v160 = vld [vmem:[%s11 + $0x10] sm:$0xf]
  %v161 = vld [vmem:[%s11 + $0x14] sm:$0xf]
  %v162 = vld [vmem:[%s11 + $0x18] sm:$0xf]
  %v163 = vld [vmem:[%s11 + $0x1c] sm:$0xf]
  %v164 = vld [vmem:[%s11 + $0x20] sm:$0xf]
  %v165 = vld [vmem:[%s11 + $0x24] sm:$0xf]
  %v166 = vld [vmem:[%s11 + $0x28] sm:$0xf]
  %v167 = vld [vmem:[%s11 + $0x2c] sm:$0xf]
  %v168 = vld [vmem:[%s11 + $0x30] sm:$0xf]
  %v169 = vld [vmem:[%s11 + $0x34] sm:$0xf]
  %v170 = vld [vmem:[%s11 + $0x38] sm:$0xf]
  %v171 = vld [vmem:[%s11 + $0x3c] sm:$0xf]
  %v172 = vld [vmem:[%s12] sm:$0xff]
  %v173 = vld [vmem:[%s12 + $0x8] sm:$0xff]
  %v174 = vld [vmem:[%s12 + $0x10] sm:$0xff]
  %v175 = vld [vmem:[%s12 + $0x18] sm:$0xff]
  %v176 = vld [vmem:[%s12 + $0x20] sm:$0xff]
  %v177 = vld [vmem:[%s12 + $0x28] sm:$0xff]
  %v178 = vld [vmem:[%s12 + $0x30] sm:$0xff]
  %v179 = vld [vmem:[%s12 + $0x38] sm:$0xff]
  %v180 = vld [vmem:[%s12 + $0x40] sm:$0xff]
  %v181 = vld [vmem:[%s12 + $0x48] sm:$0xff]
  %v182 = vld [vmem:[%s12 + $0x50] sm:$0xff]
  %v183 = vld [vmem:[%s12 + $0x58] sm:$0xff]
  %v184 = vld [vmem:[%s12 + $0x60] sm:$0xff]
  %v185 = vld [vmem:[%s12 + $0x68] sm:$0xff]
  %v186 = vld [vmem:[%s12 + $0x70] sm:$0xff]
  %v187 = vld [vmem:[%s12 + $0x78] sm:$0xff]
  %v188 = vld [vmem:[%s13] sm:$0xff]
  %v189 = vld [vmem:[%s13 + $0x8] sm:$0xff]
  %v190 = vld [vmem:[%s13 + $0x10] sm:$0xff]
  %v191 = vld [vmem:[%s13 + $0x18] sm:$0xff]
  %v192 = vld [vmem:[%s13 + $0x20] sm:$0xff]
  %v193 = vld [vmem:[%s13 + $0x28] sm:$0xff]
  %v194 = vld [vmem:[%s13 + $0x30] sm:$0xff]
  %v195 = vld [vmem:[%s13 + $0x38] sm:$0xff]
  %v196 = vld [vmem:[%s13 + $0x40] sm:$0xff]
  %v197 = vld [vmem:[%s13 + $0x48] sm:$0xff]
  %v198 = vld [vmem:[%s13 + $0x50] sm:$0xff]
  %v199 = vld [vmem:[%s13 + $0x58] sm:$0xff]
  %v200 = vld [vmem:[%s13 + $0x60] sm:$0xff]
  %v201 = vld [vmem:[%s13 + $0x68] sm:$0xff]
  %v202 = vld [vmem:[%s13 + $0x70] sm:$0xff]
  %v203 = vld [vmem:[%s13 + $0x78] sm:$0xff]
  %v204 = vlaneseq
  %v205 = vand.u32 %v204, 127
  %v206 = vadd.s32 %v205, 128
  %vm207 = vcmp.lt.s32.totalorder %v205, 0
  %v208 = vsub.s32 0, %v205
  %v209 = vsel %vm207, %v208, %v205
  %v210 = vshrl.u32 %v209, 4
  %v211 = vand.u32 %v209, 15
  %v212 = vsub.s32 0, %v211
  %v213 = vsel %vm207, %v212, %v211
  %vm214 = vcmp.lt.s32.totalorder %v206, 0
  %v215 = vsub.s32 0, %v206
  %v216 = vsel %vm214, %v215, %v206
  %v217 = vshrl.u32 %v216, 4
  %v218 = vand.u32 %v216, 15
  %v219 = vsub.s32 0, %v218
  %v220 = vsel %vm214, %v219, %v218
  %vm221 = vcmp.ne.s32.totalorder %v213, 0
  %vm222 = vcmp.ne.s32.totalorder %v220, 0
  %vm223 = vcmp.lt.s32.totalorder %v213, 0
  %vm224 = vcmp.lt.s32.totalorder %v220, 0
  %vm225 = vmand %vm223, %vm221
  %vm226 = vmand %vm224, %vm222
  %v227 = vadd.s32 %v213, 16
  %v228 = vadd.s32 %v220, 16
  %v229 = vsel %vm225, %v227, %v213
  %v230 = vsel %vm226, %v228, %v220
  %vm231 = vcmp.ge.s32.totalorder %v229, 1
  %vm232 = vcmp.ge.s32.totalorder %v230, 1
  %v233 = vsel %vm231, 1, 0
  %v234 = vsel %vm232, 1, 0
  %v235 = vcvt.s32.f32 %v233
  %v236 = vcvt.s32.f32 %v234
  %v237 = vpack.c.bf16 %v235, %v235
  %v238 = vpack.c.bf16 %v236, %v236
  %vm239 = vcmp.le.s32.totalorder %v229, 14
  %vm240 = vcmp.le.s32.totalorder %v230, 14
  %v241 = vsel %vm239, 1, 0
  %v242 = vsel %vm240, 1, 0
  %v243 = vcvt.s32.f32 %v241
  %v244 = vcvt.s32.f32 %v242
  %v245 = vpack.c.bf16 %v243, %v243
  %v246 = vpack.c.bf16 %v244, %v244
  %v247 = vld [vmem:[%s0] sm:$0xff]
  %v248 = vld [vmem:[%s0 + $0x8] sm:$0xff]
  %v249 = vld [vmem:[%s0 + $0x10] sm:$0xff]
  %v250 = vld [vmem:[%s0 + $0x18] sm:$0xff]
  %v251 = vld [vmem:[%s0 + $0x20] sm:$0xff]
  %v252 = vld [vmem:[%s0 + $0x28] sm:$0xff]
  %v253 = vld [vmem:[%s0 + $0x30] sm:$0xff]
  %v254 = vld [vmem:[%s0 + $0x38] sm:$0xff]
  %v255 = vld [vmem:[%s0 + $0x40] sm:$0xff]
  %v256 = vld [vmem:[%s0 + $0x48] sm:$0xff]
  %v257 = vld [vmem:[%s0 + $0x50] sm:$0xff]
  %v258 = vld [vmem:[%s0 + $0x58] sm:$0xff]
  %v259 = vld [vmem:[%s0 + $0x60] sm:$0xff]
  %v260 = vld [vmem:[%s0 + $0x68] sm:$0xff]
  %v261 = vld [vmem:[%s0 + $0x70] sm:$0xff]
  %v262 = vld [vmem:[%s0 + $0x78] sm:$0xff]
  %v263 = vpack.c.bf16 %v249, %v247
  %v264 = vpack.c.bf16 %v250, %v248
  %v265 = vpack.c.bf16 %v253, %v251
  %v266 = vpack.c.bf16 %v254, %v252
  %v267 = vpack.c.bf16 %v257, %v255
  %v268 = vpack.c.bf16 %v258, %v256
  %v269 = vpack.c.bf16 %v261, %v259
  %v270 = vpack.c.bf16 %v262, %v260
  %v275 = vunpack.c.l.b16 %v48
  %v276 = vunpack.c.l.b16 %v49
  %v277 = vunpack.c.l.b16 %v50
  %v278 = vunpack.c.l.b16 %v51
  %v279 = vpack.c.b16 %v276, %v275
  %v280 = vpack.c.b16 %v278, %v277
  %vm281 = vcmask 523264
  %v283 = vsel %vm281, %v279, 0
  %v286 = vsel %vm281, %v280, 0
  %288 = vmatprep.subr.bf16.mxu0 %v264
  %289 = vmatpush1.bf16.msra.mxu0 %v263
  %290 = vmatprep.subr.bf16.mxu0 %v266
  %291 = vmatpush1.bf16.msra.mxu0 %v265
  %292 = vmatprep.subr.bf16.mxu0 %v268
  %293 = vmatpush1.bf16.msra.mxu0 %v267
  %294 = vmatprep.subr.bf16.mxu0 %v270
  %295 = vmatpush1.bf16.msra.mxu0 %v269
  %296 = vmatprep.subr.bf16.mxu0 0
  %297 = vmatpush1.bf16.msra.mxu0 0
  %298 = vmatprep.subr.bf16.mxu0 0
  %299 = vmatpush1.bf16.msra.mxu0 0
  %300 = vmatprep.subr.bf16.mxu0 0
  %301 = vmatpush1.bf16.msra.mxu0 0
  %302 = vmatprep.subr.bf16.mxu0 0
  %303 = vmatpush1.bf16.msra.mxu0 0
  %304 = vmatprep.subr.bf16.mxu0 0
  %305 = vmatpush1.bf16.msra.mxu0 0
  %306 = vmatprep.subr.bf16.mxu0 0
  %307 = vmatpush1.bf16.msra.mxu0 0
  %308 = vmatprep.subr.bf16.mxu0 0
  %309 = vmatpush1.bf16.msra.mxu0 0
  %310 = vmatprep.subr.bf16.mxu0 0
  %311 = vmatpush1.bf16.msra.mxu0 0
  %312 = vmatprep.subr.bf16.mxu0 0
  %313 = vmatpush1.bf16.msra.mxu0 0
  %314 = vmatprep.subr.bf16.mxu0 0
  %315 = vmatpush1.bf16.msra.mxu0 0
  %316 = vmatprep.subr.bf16.mxu0 0
  %317 = vmatpush1.bf16.msra.mxu0 0
  %318 = vmatprep.subr.bf16.mxu0 0
  %319 = vmatpush1.bf16.msra.mxu0 0
  %320 = vmatprep.mubr.bf16.mxu0 0
  %321 = vmatmul.mubr.bf16.gmra.mrb[0].mxu0 %v283
  %v322 = vpop.f32.mrb[0].mxu0
  %v323 = vadd.f32 0.0, %v322
  %v324 = vpop.f32.mrb[0].mxu0
  %v325 = vadd.f32 0.0, %v324
  %v326 = vpop.f32.mrb[0].mxu0
  %v327 = vadd.f32 0.0, %v326
  %v328 = vpop.f32.mrb[0].mxu0
  %v329 = vadd.f32 0.0, %v328
  %330 = vmatprep.mubr.bf16.mxu0 0
  %331 = vmatmul.mubr.bf16.gmra.mrb[0].mxu0 %v286
  %v332 = vpop.f32.mrb[0].mxu0
  %v333 = vadd.f32 0.0, %v332
  %v334 = vpop.f32.mrb[0].mxu0
  %v335 = vadd.f32 0.0, %v334
  %v336 = vpop.f32.mrb[0].mxu0
  %v337 = vadd.f32 0.0, %v336
  %v338 = vpop.f32.mrb[0].mxu0
  %v339 = vadd.f32 0.0, %v338
  %340 = vdwg.mxu0
  %342 = vset.pattern.permute.xlu0 0
  %343 = vperm.xlu0 %342, %v76
  %v344 = vpop.permute.xlu0 %343
  %347 = vset.pattern.permute.xlu0 0
  %348 = vperm.xlu0 %347, %v77
  %v349 = vpop.permute.xlu0 %348
  %352 = vset.pattern.permute.xlu0 0
  %353 = vperm.xlu0 %352, %v78
  %v354 = vpop.permute.xlu0 %353
  %357 = vset.pattern.permute.xlu0 0
  %358 = vperm.xlu0 %357, %v79
  %v359 = vpop.permute.xlu0 %358
  %v361 = vmul.f32 %v323, %v344
  %v362 = vmul.f32 %v325, %v344
  %v363 = vmul.f32 %v327, %v349
  %v364 = vmul.f32 %v329, %v349
  %v365 = vmul.f32 %v333, %v354
  %v366 = vmul.f32 %v335, %v354
  %v367 = vmul.f32 %v337, %v359
  %v368 = vmul.f32 %v339, %v359
  %370 = vset.pattern.permute.xlu0 0
  %371 = vperm.xlu0 %370, %v80
  %v372 = vpop.permute.xlu0 %371
  %375 = vset.pattern.permute.xlu0 0
  %376 = vperm.xlu0 %375, %v81
  %v377 = vpop.permute.xlu0 %376
  %380 = vset.pattern.permute.xlu0 0
  %381 = vperm.xlu0 %380, %v82
  %v382 = vpop.permute.xlu0 %381
  %385 = vset.pattern.permute.xlu0 0
  %386 = vperm.xlu0 %385, %v83
  %v387 = vpop.permute.xlu0 %386
  %v389 = vadd.f32 %v361, %v372
  %v390 = vadd.f32 %v362, %v372
  %v391 = vadd.f32 %v363, %v377
  %v392 = vadd.f32 %v364, %v377
  %v393 = vadd.f32 %v365, %v382
  %v394 = vadd.f32 %v366, %v382
  %v395 = vadd.f32 %v367, %v387
  %v396 = vadd.f32 %v368, %v387
  %v397 = vmax.f32 %v389, 0.0
  %v398 = vmax.f32 %v390, 0.0
  %v399 = vmax.f32 %v391, 0.0
  %v400 = vmax.f32 %v392, 0.0
  %v401 = vmax.f32 %v393, 0.0
  %v402 = vmax.f32 %v394, 0.0
  %v403 = vmax.f32 %v395, 0.0
  %v404 = vmax.f32 %v396, 0.0
  %v405 = vpack.c.bf16 %v399, %v397
  %v406 = vpack.c.bf16 %v400, %v398
  %v407 = vpack.c.bf16 %v403, %v401
  %v408 = vpack.c.bf16 %v404, %v402
  %413 = vrot.lane.b32.xlu0 %v405, 17
  %v414 = vpop.permute.xlu0 %413
  %415 = vrot.lane.b32.xlu0 %v406, 17
  %v416 = vpop.permute.xlu0 %415
  %417 = vrot.lane.b32.xlu0 %v407, 17
  %v418 = vpop.permute.xlu0 %417
  %419 = vrot.lane.b32.xlu0 %v408, 17
  %v420 = vpop.permute.xlu0 %419
  %vm421 = vcmask 138240
  %v422 = vsel %vm421, %v414, %v416
  %v423 = vsel %vm421, %v418, %v420
  %vm426 = vcmask 138240
  %v429 = vsel %vm426, 0, %v414
  %v432 = vsel %vm426, 0, %v418
  %v435 = vsel %vm426, %v416, 0
  %v438 = vsel %vm426, %v420, 0
  %v440 = vmul.bf16 %v429, %v237
  %v441 = vmul.bf16 %v422, %v238
  %v442 = vmul.bf16 %v432, %v237
  %v443 = vmul.bf16 %v423, %v238
  %446 = vrot.lane.b32.xlu0 %v245, 2
  %v447 = vpop.permute.xlu0 %446
  %448 = vrot.lane.b32.xlu0 %v246, 2
  %v449 = vpop.permute.xlu0 %448
  %vm450 = vcmask 15360
  %v451 = vsel %vm450, %v447, %v449
  %v455 = vmul.bf16 %v429, %v447
  %v456 = vmul.bf16 %v422, %v451
  %v457 = vmul.bf16 %v435, %v449
  %v458 = vmul.bf16 %v432, %v447
  %v459 = vmul.bf16 %v423, %v451
  %v460 = vmul.bf16 %v438, %v449
  %463 = vrot.lane.b32.xlu0 %v237, 16
  %v464 = vpop.permute.xlu0 %463
  %465 = vrot.lane.b32.xlu0 %v238, 16
  %v466 = vpop.permute.xlu0 %465
  %vm467 = vcmask 130048
  %v468 = vsel %vm467, %v464, %v466
  %v472 = vmul.bf16 %v429, %v464
  %v473 = vmul.bf16 %v422, %v468
  %v474 = vmul.bf16 %v435, %v466
  %v475 = vmul.bf16 %v432, %v464
  %v476 = vmul.bf16 %v423, %v468
  %v477 = vmul.bf16 %v438, %v466
  %478 = vrot.lane.b32.xlu0 %v245, 18
  %v479 = vpop.permute.xlu0 %478
  %480 = vrot.lane.b32.xlu0 %v246, 18
  %v481 = vpop.permute.xlu0 %480
  %vm482 = vcmask 146432
  %v483 = vsel %vm482, %v479, %v481
  %v487 = vmul.bf16 %v429, %v479
  %v488 = vmul.bf16 %v422, %v483
  %v489 = vmul.bf16 %v435, %v481
  %v490 = vmul.bf16 %v432, %v479
  %v491 = vmul.bf16 %v423, %v483
  %v492 = vmul.bf16 %v438, %v481
  %493 = vrot.lane.b32.xlu0 %v237, 32
  %v494 = vpop.permute.xlu0 %493
  %495 = vrot.lane.b32.xlu0 %v238, 32
  %v496 = vpop.permute.xlu0 %495
  %vm497 = vcmask 261120
  %v498 = vsel %vm497, %v494, %v496
  %v502 = vmul.bf16 %v429, %v494
  %v503 = vmul.bf16 %v422, %v498
  %v504 = vmul.bf16 %v435, %v496
  %v505 = vmul.bf16 %v432, %v494
  %v506 = vmul.bf16 %v423, %v498
  %v507 = vmul.bf16 %v438, %v496
  %508 = vrot.lane.b32.xlu0 %v245, 34
  %v509 = vpop.permute.xlu0 %508
  %510 = vrot.lane.b32.xlu0 %v246, 34
  %v511 = vpop.permute.xlu0 %510
  %vm512 = vcmask 277504
  %v513 = vsel %vm512, %v509, %v511
  %v517 = vmul.bf16 %v429, %v509
  %v518 = vmul.bf16 %v422, %v513
  %v519 = vmul.bf16 %v435, %v511
  %v520 = vmul.bf16 %v432, %v509
  %v521 = vmul.bf16 %v423, %v513
  %v522 = vmul.bf16 %v438, %v511
  %527 = vrot.lane.b32.xlu0 %v429, 127
  %v528 = vpop.permute.xlu0 %527
  %529 = vrot.lane.b32.xlu0 %v422, 127
  %v530 = vpop.permute.xlu0 %529
  %531 = vrot.lane.b32.xlu0 %v435, 127
  %v532 = vpop.permute.xlu0 %531
  %533 = vrot.lane.b32.xlu0 %v432, 127
  %v534 = vpop.permute.xlu0 %533
  %535 = vrot.lane.b32.xlu0 %v423, 127
  %v536 = vpop.permute.xlu0 %535
  %537 = vrot.lane.b32.xlu0 %v438, 127
  %v538 = vpop.permute.xlu0 %537
  %vm539 = vcmask 1039360
  %v540 = vsel %vm539, %v528, %v530
  %v541 = vsel %vm539, %v530, %v532
  %v542 = vsel %vm539, %v534, %v536
  %v543 = vsel %vm539, %v536, %v538
  %554 = vrot.lane.b32.xlu0 %v455, 126
  %v555 = vpop.permute.xlu0 %554
  %556 = vrot.lane.b32.xlu0 %v456, 126
  %v557 = vpop.permute.xlu0 %556
  %558 = vrot.lane.b32.xlu0 %v457, 126
  %v559 = vpop.permute.xlu0 %558
  %560 = vrot.lane.b32.xlu0 %v458, 126
  %v561 = vpop.permute.xlu0 %560
  %562 = vrot.lane.b32.xlu0 %v459, 126
  %v563 = vpop.permute.xlu0 %562
  %564 = vrot.lane.b32.xlu0 %v460, 126
  %v565 = vpop.permute.xlu0 %564
  %vm566 = vcmask 1031168
  %v567 = vsel %vm566, %v555, %v557
  %v568 = vsel %vm566, %v557, %v559
  %v569 = vsel %vm566, %v561, %v563
  %v570 = vsel %vm566, %v563, %v565
  %581 = vrot.lane.b32.xlu0 %v472, 112
  %v582 = vpop.permute.xlu0 %581
  %583 = vrot.lane.b32.xlu0 %v473, 112
  %v584 = vpop.permute.xlu0 %583
  %585 = vrot.lane.b32.xlu0 %v474, 112
  %v586 = vpop.permute.xlu0 %585
  %587 = vrot.lane.b32.xlu0 %v475, 112
  %v588 = vpop.permute.xlu0 %587
  %589 = vrot.lane.b32.xlu0 %v476, 112
  %v590 = vpop.permute.xlu0 %589
  %591 = vrot.lane.b32.xlu0 %v477, 112
  %v592 = vpop.permute.xlu0 %591
  %vm593 = vcmask 916480
  %v594 = vsel %vm593, %v582, %v584
  %v595 = vsel %vm593, %v584, %v586
  %v596 = vsel %vm593, %v588, %v590
  %v597 = vsel %vm593, %v590, %v592
  %602 = vrot.lane.b32.xlu0 %v429, 111
  %v603 = vpop.permute.xlu0 %602
  %604 = vrot.lane.b32.xlu0 %v422, 111
  %v605 = vpop.permute.xlu0 %604
  %606 = vrot.lane.b32.xlu0 %v435, 111
  %v607 = vpop.permute.xlu0 %606
  %608 = vrot.lane.b32.xlu0 %v432, 111
  %v609 = vpop.permute.xlu0 %608
  %610 = vrot.lane.b32.xlu0 %v423, 111
  %v611 = vpop.permute.xlu0 %610
  %612 = vrot.lane.b32.xlu0 %v438, 111
  %v613 = vpop.permute.xlu0 %612
  %vm614 = vcmask 908288
  %v615 = vsel %vm614, %v603, %v605
  %v616 = vsel %vm614, %v605, %v607
  %v617 = vsel %vm614, %v609, %v611
  %v618 = vsel %vm614, %v611, %v613
  %629 = vrot.lane.b32.xlu0 %v487, 110
  %v630 = vpop.permute.xlu0 %629
  %631 = vrot.lane.b32.xlu0 %v488, 110
  %v632 = vpop.permute.xlu0 %631
  %633 = vrot.lane.b32.xlu0 %v489, 110
  %v634 = vpop.permute.xlu0 %633
  %635 = vrot.lane.b32.xlu0 %v490, 110
  %v636 = vpop.permute.xlu0 %635
  %637 = vrot.lane.b32.xlu0 %v491, 110
  %v638 = vpop.permute.xlu0 %637
  %639 = vrot.lane.b32.xlu0 %v492, 110
  %v640 = vpop.permute.xlu0 %639
  %vm641 = vcmask 900096
  %v642 = vsel %vm641, %v630, %v632
  %v643 = vsel %vm641, %v632, %v634
  %v644 = vsel %vm641, %v636, %v638
  %v645 = vsel %vm641, %v638, %v640
  %656 = vrot.lane.b32.xlu0 %v502, 96
  %v657 = vpop.permute.xlu0 %656
  %658 = vrot.lane.b32.xlu0 %v503, 96
  %v659 = vpop.permute.xlu0 %658
  %660 = vrot.lane.b32.xlu0 %v504, 96
  %v661 = vpop.permute.xlu0 %660
  %662 = vrot.lane.b32.xlu0 %v505, 96
  %v663 = vpop.permute.xlu0 %662
  %664 = vrot.lane.b32.xlu0 %v506, 96
  %v665 = vpop.permute.xlu0 %664
  %666 = vrot.lane.b32.xlu0 %v507, 96
  %v667 = vpop.permute.xlu0 %666
  %vm668 = vcmask 785408
  %v669 = vsel %vm668, %v657, %v659
  %v670 = vsel %vm668, %v659, %v661
  %v671 = vsel %vm668, %v663, %v665
  %v672 = vsel %vm668, %v665, %v667
  %677 = vrot.lane.b32.xlu0 %v429, 95
  %v678 = vpop.permute.xlu0 %677
  %679 = vrot.lane.b32.xlu0 %v422, 95
  %v680 = vpop.permute.xlu0 %679
  %681 = vrot.lane.b32.xlu0 %v435, 95
  %v682 = vpop.permute.xlu0 %681
  %683 = vrot.lane.b32.xlu0 %v432, 95
  %v684 = vpop.permute.xlu0 %683
  %685 = vrot.lane.b32.xlu0 %v423, 95
  %v686 = vpop.permute.xlu0 %685
  %687 = vrot.lane.b32.xlu0 %v438, 95
  %v688 = vpop.permute.xlu0 %687
  %vm689 = vcmask 777216
  %v690 = vsel %vm689, %v678, %v680
  %v691 = vsel %vm689, %v680, %v682
  %v692 = vsel %vm689, %v684, %v686
  %v693 = vsel %vm689, %v686, %v688
  %704 = vrot.lane.b32.xlu0 %v517, 94
  %v705 = vpop.permute.xlu0 %704
  %706 = vrot.lane.b32.xlu0 %v518, 94
  %v707 = vpop.permute.xlu0 %706
  %708 = vrot.lane.b32.xlu0 %v519, 94
  %v709 = vpop.permute.xlu0 %708
  %710 = vrot.lane.b32.xlu0 %v520, 94
  %v711 = vpop.permute.xlu0 %710
  %712 = vrot.lane.b32.xlu0 %v521, 94
  %v713 = vpop.permute.xlu0 %712
  %714 = vrot.lane.b32.xlu0 %v522, 94
  %v715 = vpop.permute.xlu0 %714
  %vm716 = vcmask 769024
  %v717 = vsel %vm716, %v705, %v707
  %v718 = vsel %vm716, %v707, %v709
  %v719 = vsel %vm716, %v711, %v713
  %v720 = vsel %vm716, %v713, %v715
  %v733 = vunpack.c.l.b16 %v52
  %v734 = vunpack.c.h.b16 %v52
  %v735 = vunpack.c.l.b16 %v53
  %v736 = vunpack.c.l.b16 %v54
  %v737 = vunpack.c.h.b16 %v54
  %v738 = vunpack.c.l.b16 %v55
  %v739 = vunpack.c.l.b16 %v56
  %v740 = vunpack.c.h.b16 %v56
  %v741 = vunpack.c.l.b16 %v57
  %v742 = vunpack.c.l.b16 %v58
  %v743 = vunpack.c.h.b16 %v58
  %v744 = vunpack.c.l.b16 %v59
  %v745 = vpack.c.b16 %v736, %v733
  %v746 = vpack.c.b16 %v737, %v734
  %v747 = vpack.c.b16 %v738, %v735
  %v748 = vpack.c.b16 %v742, %v739
  %v749 = vpack.c.b16 %v743, %v740
  %v750 = vpack.c.b16 %v744, %v741
  %vm755 = vcmask 261120
  %v757 = vsel %vm755, %v747, 0
  %v760 = vsel %vm755, %v750, 0
  %762 = vmatprep.subr.bf16.mxu0 %v441
  %763 = vmatpush1.bf16.msra.mxu0 %v440
  %764 = vmatprep.subr.bf16.mxu0 %v443
  %765 = vmatpush1.bf16.msra.mxu0 %v442
  %766 = vmatprep.subr.bf16.mxu0 %v541
  %767 = vmatpush1.bf16.msra.mxu0 %v540
  %768 = vmatprep.subr.bf16.mxu0 %v543
  %769 = vmatpush1.bf16.msra.mxu0 %v542
  %770 = vmatprep.subr.bf16.mxu0 %v568
  %771 = vmatpush1.bf16.msra.mxu0 %v567
  %772 = vmatprep.subr.bf16.mxu0 %v570
  %773 = vmatpush1.bf16.msra.mxu0 %v569
  %774 = vmatprep.subr.bf16.mxu0 %v595
  %775 = vmatpush1.bf16.msra.mxu0 %v594
  %776 = vmatprep.subr.bf16.mxu0 %v597
  %777 = vmatpush1.bf16.msra.mxu0 %v596
  %778 = vmatprep.subr.bf16.mxu0 %v616
  %779 = vmatpush1.bf16.msra.mxu0 %v615
  %780 = vmatprep.subr.bf16.mxu0 %v618
  %781 = vmatpush1.bf16.msra.mxu0 %v617
  %782 = vmatprep.subr.bf16.mxu0 %v643
  %783 = vmatpush1.bf16.msra.mxu0 %v642
  %784 = vmatprep.subr.bf16.mxu0 %v645
  %785 = vmatpush1.bf16.msra.mxu0 %v644
  %786 = vmatprep.subr.bf16.mxu0 %v670
  %787 = vmatpush1.bf16.msra.mxu0 %v669
  %788 = vmatprep.subr.bf16.mxu0 %v672
  %789 = vmatpush1.bf16.msra.mxu0 %v671
  %790 = vmatprep.subr.bf16.mxu0 %v691
  %791 = vmatpush1.bf16.msra.mxu0 %v690
  %792 = vmatprep.subr.bf16.mxu0 %v693
  %793 = vmatpush1.bf16.msra.mxu0 %v692
  %794 = vmatprep.mubr.bf16.mxu0 %v746
  %795 = vmatmul.mubr.bf16.gmra.mrb[0].mxu0 %v745
  %v796 = vpop.f32.mrb[0].mxu0
  %v797 = vadd.f32 0.0, %v796
  %v798 = vpop.f32.mrb[0].mxu0
  %v799 = vadd.f32 0.0, %v798
  %v800 = vpop.f32.mrb[0].mxu0
  %v801 = vadd.f32 0.0, %v800
  %v802 = vpop.f32.mrb[0].mxu0
  %v803 = vadd.f32 0.0, %v802
  %804 = vmatprep.mubr.bf16.mxu0 %v749
  %805 = vmatmul.mubr.bf16.gmra.mrb[0].mxu0 %v748
  %v806 = vpop.f32.mrb[0].mxu0
  %v807 = vadd.f32 0.0, %v806
  %v808 = vpop.f32.mrb[0].mxu0
  %v809 = vadd.f32 0.0, %v808
  %v810 = vpop.f32.mrb[0].mxu0
  %v811 = vadd.f32 0.0, %v810
  %v812 = vpop.f32.mrb[0].mxu0
  %v813 = vadd.f32 0.0, %v812
  %814 = vdwg.mxu0
  %815 = vmatprep.subr.bf16.mxu0 %v718
  %816 = vmatpush1.bf16.msra.mxu0 %v717
  %817 = vmatprep.subr.bf16.mxu0 %v720
  %818 = vmatpush1.bf16.msra.mxu0 %v719
  %819 = vmatprep.subr.bf16.mxu0 0
  %820 = vmatpush1.bf16.msra.mxu0 0
  %821 = vmatprep.subr.bf16.mxu0 0
  %822 = vmatpush1.bf16.msra.mxu0 0
  %823 = vmatprep.subr.bf16.mxu0 0
  %824 = vmatpush1.bf16.msra.mxu0 0
  %825 = vmatprep.subr.bf16.mxu0 0
  %826 = vmatpush1.bf16.msra.mxu0 0
  %827 = vmatprep.subr.bf16.mxu0 0
  %828 = vmatpush1.bf16.msra.mxu0 0
  %829 = vmatprep.subr.bf16.mxu0 0
  %830 = vmatpush1.bf16.msra.mxu0 0
  %831 = vmatprep.subr.bf16.mxu0 0
  %832 = vmatpush1.bf16.msra.mxu0 0
  %833 = vmatprep.subr.bf16.mxu0 0
  %834 = vmatpush1.bf16.msra.mxu0 0
  %835 = vmatprep.subr.bf16.mxu0 0
  %836 = vmatpush1.bf16.msra.mxu0 0
  %837 = vmatprep.subr.bf16.mxu0 0
  %838 = vmatpush1.bf16.msra.mxu0 0
  %839 = vmatprep.subr.bf16.mxu0 0
  %840 = vmatpush1.bf16.msra.mxu0 0
  %841 = vmatprep.subr.bf16.mxu0 0
  %842 = vmatpush1.bf16.msra.mxu0 0
  %843 = vmatprep.subr.bf16.mxu0 0
  %844 = vmatpush1.bf16.msra.mxu0 0
  %845 = vmatprep.subr.bf16.mxu0 0
  %846 = vmatpush1.bf16.msra.mxu0 0
  %847 = vmatprep.mubr.bf16.mxu0 0
  %848 = vmatmul.mubr.bf16.gmra.mrb[0].mxu0 %v757
  %v849 = vpop.f32.mrb[0].mxu0
  %v850 = vadd.f32 %v797, %v849
  %v851 = vpop.f32.mrb[0].mxu0
  %v852 = vadd.f32 %v799, %v851
  %v853 = vpop.f32.mrb[0].mxu0
  %v854 = vadd.f32 %v801, %v853
  %v855 = vpop.f32.mrb[0].mxu0
  %v856 = vadd.f32 %v803, %v855
  %857 = vmatprep.mubr.bf16.mxu0 0
  %858 = vmatmul.mubr.bf16.gmra.mrb[0].mxu0 %v760
  %v859 = vpop.f32.mrb[0].mxu0
  %v860 = vadd.f32 %v807, %v859
  %v861 = vpop.f32.mrb[0].mxu0
  %v862 = vadd.f32 %v809, %v861
  %v863 = vpop.f32.mrb[0].mxu0
  %v864 = vadd.f32 %v811, %v863
  %v865 = vpop.f32.mrb[0].mxu0
  %v866 = vadd.f32 %v813, %v865
  %867 = vdwg.mxu0
  %869 = vset.pattern.permute.xlu0 0
  %870 = vperm.xlu0 %869, %v84
  %v871 = vpop.permute.xlu0 %870
  %874 = vset.pattern.permute.xlu0 0
  %875 = vperm.xlu0 %874, %v85
  %v876 = vpop.permute.xlu0 %875
  %879 = vset.pattern.permute.xlu0 0
  %880 = vperm.xlu0 %879, %v86
  %v881 = vpop.permute.xlu0 %880
  %884 = vset.pattern.permute.xlu0 0
  %885 = vperm.xlu0 %884, %v87
  %v886 = vpop.permute.xlu0 %885
  %v888 = vmul.f32 %v850, %v871
  %v889 = vmul.f32 %v852, %v871
  %v890 = vmul.f32 %v854, %v876
  %v891 = vmul.f32 %v856, %v876
  %v892 = vmul.f32 %v860, %v881
  %v893 = vmul.f32 %v862, %v881
  %v894 = vmul.f32 %v864, %v886
  %v895 = vmul.f32 %v866, %v886
  %897 = vset.pattern.permute.xlu0 0
  %898 = vperm.xlu0 %897, %v88
  %v899 = vpop.permute.xlu0 %898
  %902 = vset.pattern.permute.xlu0 0
  %903 = vperm.xlu0 %902, %v89
  %v904 = vpop.permute.xlu0 %903
  %907 = vset.pattern.permute.xlu0 0
  %908 = vperm.xlu0 %907, %v90
  %v909 = vpop.permute.xlu0 %908
  %912 = vset.pattern.permute.xlu0 0
  %913 = vperm.xlu0 %912, %v91
  %v914 = vpop.permute.xlu0 %913
  %v916 = vadd.f32 %v888, %v899
  %v917 = vadd.f32 %v889, %v899
  %v918 = vadd.f32 %v890, %v904
  %v919 = vadd.f32 %v891, %v904
  %v920 = vadd.f32 %v892, %v909
  %v921 = vadd.f32 %v893, %v909
  %v922 = vadd.f32 %v894, %v914
  %v923 = vadd.f32 %v895, %v914
  %v924 = vmax.f32 %v916, 0.0
  %v925 = vmax.f32 %v917, 0.0
  %v926 = vmax.f32 %v918, 0.0
  %v927 = vmax.f32 %v919, 0.0
  %v928 = vmax.f32 %v920, 0.0
  %v929 = vmax.f32 %v921, 0.0
  %v930 = vmax.f32 %v922, 0.0
  %v931 = vmax.f32 %v923, 0.0
  %v932 = vpack.c.bf16 %v926, %v924
  %v933 = vpack.c.bf16 %v927, %v925
  %v934 = vpack.c.bf16 %v930, %v928
  %v935 = vpack.c.bf16 %v931, %v929
  %v968 = vunpack.c.l.b16 %v124
  %v969 = vunpack.c.l.b16 %v125
  %v970 = vunpack.c.l.b16 %v126
  %v971 = vunpack.c.l.b16 %v127
  %v972 = vunpack.c.l.b16 %v128
  %v973 = vunpack.c.l.b16 %v129
  %v974 = vunpack.c.l.b16 %v130
  %v975 = vunpack.c.l.b16 %v131
  %v976 = vunpack.c.l.b16 %v132
  %v977 = vunpack.c.l.b16 %v133
  %v978 = vunpack.c.l.b16 %v134
  %v979 = vunpack.c.l.b16 %v135
  %v980 = vunpack.c.l.b16 %v136
  %v981 = vunpack.c.l.b16 %v137
  %v982 = vunpack.c.l.b16 %v138
  %v983 = vunpack.c.l.b16 %v139
  %v984 = vunpack.c.l.b16 %v140
  %v985 = vunpack.c.l.b16 %v141
  %v986 = vunpack.c.l.b16 %v142
  %v987 = vunpack.c.l.b16 %v143
  %v988 = vunpack.c.l.b16 %v144
  %v989 = vunpack.c.l.b16 %v145
  %v990 = vunpack.c.l.b16 %v146
  %v991 = vunpack.c.l.b16 %v147
  %v992 = vunpack.c.l.b16 %v148
  %v993 = vunpack.c.l.b16 %v149
  %v994 = vunpack.c.l.b16 %v150
  %v995 = vunpack.c.l.b16 %v151
  %v996 = vunpack.c.l.b16 %v152
  %v997 = vunpack.c.l.b16 %v153
  %v998 = vunpack.c.l.b16 %v154
  %v999 = vunpack.c.l.b16 %v155
  %v1000 = vpack.c.b16 %v969, %v968
  %v1001 = vpack.c.b16 %v971, %v970
  %v1002 = vpack.c.b16 %v973, %v972
  %v1003 = vpack.c.b16 %v975, %v974
  %v1004 = vpack.c.b16 %v977, %v976
  %v1005 = vpack.c.b16 %v979, %v978
  %v1006 = vpack.c.b16 %v981, %v980
  %v1007 = vpack.c.b16 %v983, %v982
  %v1008 = vpack.c.b16 %v985, %v984
  %v1009 = vpack.c.b16 %v987, %v986
  %v1010 = vpack.c.b16 %v989, %v988
  %v1011 = vpack.c.b16 %v991, %v990
  %v1012 = vpack.c.b16 %v993, %v992
  %v1013 = vpack.c.b16 %v995, %v994
  %v1014 = vpack.c.b16 %v997, %v996
  %v1015 = vpack.c.b16 %v999, %v998
  %1032 = vmatprep.subr.bf16.mxu0 0
  %1033 = vmatpush1.bf16.msra.mxu0 %v1000
  %1034 = vmatprep.subr.bf16.mxu0 0
  %1035 = vmatpush1.bf16.msra.mxu0 %v1001
  %1036 = vmatprep.subr.bf16.mxu0 0
  %1037 = vmatpush1.bf16.msra.mxu0 %v1002
  %1038 = vmatprep.subr.bf16.mxu0 0
  %1039 = vmatpush1.bf16.msra.mxu0 %v1003
  %1040 = vmatprep.subr.bf16.mxu0 0
  %1041 = vmatpush1.bf16.msra.mxu0 %v1004
  %1042 = vmatprep.subr.bf16.mxu0 0
  %1043 = vmatpush1.bf16.msra.mxu0 %v1005
  %1044 = vmatprep.subr.bf16.mxu0 0
  %1045 = vmatpush1.bf16.msra.mxu0 %v1006
  %1046 = vmatprep.subr.bf16.mxu0 0
  %1047 = vmatpush1.bf16.msra.mxu0 %v1007
  %1048 = vmatprep.subr.bf16.mxu0 0
  %1049 = vmatpush1.bf16.msra.mxu0 %v1008
  %1050 = vmatprep.subr.bf16.mxu0 0
  %1051 = vmatpush1.bf16.msra.mxu0 %v1009
  %1052 = vmatprep.subr.bf16.mxu0 0
  %1053 = vmatpush1.bf16.msra.mxu0 %v1010
  %1054 = vmatprep.subr.bf16.mxu0 0
  %1055 = vmatpush1.bf16.msra.mxu0 %v1011
  %1056 = vmatprep.subr.bf16.mxu0 0
  %1057 = vmatpush1.bf16.msra.mxu0 %v1012
  %1058 = vmatprep.subr.bf16.mxu0 0
  %1059 = vmatpush1.bf16.msra.mxu0 %v1013
  %1060 = vmatprep.subr.bf16.mxu0 0
  %1061 = vmatpush1.bf16.msra.mxu0 %v1014
  %1062 = vmatprep.subr.bf16.mxu0 0
  %1063 = vmatpush1.bf16.msra.mxu0 %v1015
  %1064 = vmatprep.mubr.bf16.mxu0 %v933
  %1065 = vmatmul.mubr.bf16.gmra.mrb[0].mxu0 %v932
  %v1066 = vpop.f32.mrb[0].mxu0
  %v1067 = vadd.f32 0.0, %v1066
  %v1068 = vpop.f32.mrb[0].mxu0
  %v1069 = vpop.f32.mrb[0].mxu0
  %v1070 = vadd.f32 0.0, %v1069
  %v1071 = vpop.f32.mrb[0].mxu0
  %1072 = vmatprep.mubr.bf16.mxu0 %v935
  %1073 = vmatmul.mubr.bf16.gmra.mrb[0].mxu0 %v934
  %v1074 = vpop.f32.mrb[0].mxu0
  %v1075 = vadd.f32 0.0, %v1074
  %v1076 = vpop.f32.mrb[0].mxu0
  %v1077 = vpop.f32.mrb[0].mxu0
  %v1078 = vadd.f32 0.0, %v1077
  %v1079 = vpop.f32.mrb[0].mxu0
  %1080 = vdwg.mxu0
  %v1081 = vpack.c.bf16 %v1070, %v1067
  %v1082 = vpack.c.bf16 %v1078, %v1075
  %v1099 = vunpack.c.l.b16 %v60
  %v1100 = vunpack.c.l.b16 %v61
  %v1101 = vunpack.c.l.b16 %v62
  %v1102 = vunpack.c.l.b16 %v63
  %v1103 = vunpack.c.l.b16 %v64
  %v1104 = vunpack.c.l.b16 %v65
  %v1105 = vunpack.c.l.b16 %v66
  %v1106 = vunpack.c.l.b16 %v67
  %v1107 = vunpack.c.l.b16 %v68
  %v1108 = vunpack.c.l.b16 %v69
  %v1109 = vunpack.c.l.b16 %v70
  %v1110 = vunpack.c.l.b16 %v71
  %v1111 = vunpack.c.l.b16 %v72
  %v1112 = vunpack.c.l.b16 %v73
  %v1113 = vunpack.c.l.b16 %v74
  %v1114 = vunpack.c.l.b16 %v75
  %v1115 = vpack.c.b16 %v1100, %v1099
  %v1116 = vpack.c.b16 %v1102, %v1101
  %v1117 = vpack.c.b16 %v1104, %v1103
  %v1118 = vpack.c.b16 %v1106, %v1105
  %v1119 = vpack.c.b16 %v1108, %v1107
  %v1120 = vpack.c.b16 %v1110, %v1109
  %v1121 = vpack.c.b16 %v1112, %v1111
  %v1122 = vpack.c.b16 %v1114, %v1113
  %v1124 = vsel %vm755, %v1115, 0
  %v1127 = vsel %vm755, %v1116, 0
  %v1130 = vsel %vm755, %v1117, 0
  %v1133 = vsel %vm755, %v1118, 0
  %v1136 = vsel %vm755, %v1119, 0
  %v1139 = vsel %vm755, %v1120, 0
  %v1142 = vsel %vm755, %v1121, 0
  %v1145 = vsel %vm755, %v1122, 0
  %1147 = vmatprep.subr.bf16.mxu0 0
  %1148 = vmatpush1.bf16.msra.mxu0 %v1081
  %1149 = vmatprep.subr.bf16.mxu0 0
  %1150 = vmatpush1.bf16.msra.mxu0 %v1082
  %1151 = vmatprep.subr.bf16.mxu0 0
  %1152 = vmatpush1.bf16.msra.mxu0 0
  %1153 = vmatprep.subr.bf16.mxu0 0
  %1154 = vmatpush1.bf16.msra.mxu0 0
  %1155 = vmatprep.subr.bf16.mxu0 0
  %1156 = vmatpush1.bf16.msra.mxu0 0
  %1157 = vmatprep.subr.bf16.mxu0 0
  %1158 = vmatpush1.bf16.msra.mxu0 0
  %1159 = vmatprep.subr.bf16.mxu0 0
  %1160 = vmatpush1.bf16.msra.mxu0 0
  %1161 = vmatprep.subr.bf16.mxu0 0
  %1162 = vmatpush1.bf16.msra.mxu0 0
  %1163 = vmatprep.subr.bf16.mxu0 0
  %1164 = vmatpush1.bf16.msra.mxu0 0
  %1165 = vmatprep.subr.bf16.mxu0 0
  %1166 = vmatpush1.bf16.msra.mxu0 0
  %1167 = vmatprep.subr.bf16.mxu0 0
  %1168 = vmatpush1.bf16.msra.mxu0 0
  %1169 = vmatprep.subr.bf16.mxu0 0
  %1170 = vmatpush1.bf16.msra.mxu0 0
  %1171 = vmatprep.subr.bf16.mxu0 0
  %1172 = vmatpush1.bf16.msra.mxu0 0
  %1173 = vmatprep.subr.bf16.mxu0 0
  %1174 = vmatpush1.bf16.msra.mxu0 0
  %1175 = vmatprep.subr.bf16.mxu0 0
  %1176 = vmatpush1.bf16.msra.mxu0 0
  %1177 = vmatprep.subr.bf16.mxu0 0
  %1178 = vmatpush1.bf16.msra.mxu0 0
  %1179 = vmatprep.mubr.bf16.mxu0 0
  %1180 = vmatmul.mubr.bf16.gmra.mrb[0].mxu0 %v1124
  %v1181 = vpop.f32.mrb[0].mxu0
  %v1182 = vadd.f32 0.0, %v1181
  %v1183 = vpop.f32.mrb[0].mxu0
  %v1184 = vpop.f32.mrb[0].mxu0
  %v1185 = vadd.f32 0.0, %v1184
  %v1186 = vpop.f32.mrb[0].mxu0
  %1187 = vmatprep.mubr.bf16.mxu0 0
  %1188 = vmatmul.mubr.bf16.gmra.mrb[0].mxu0 %v1127
  %v1189 = vpop.f32.mrb[0].mxu0
  %v1190 = vadd.f32 0.0, %v1189
  %v1191 = vpop.f32.mrb[0].mxu0
  %v1192 = vpop.f32.mrb[0].mxu0
  %v1193 = vadd.f32 0.0, %v1192
  %v1194 = vpop.f32.mrb[0].mxu0
  %1195 = vmatprep.mubr.bf16.mxu0 0
  %1196 = vmatmul.mubr.bf16.gmra.mrb[0].mxu0 %v1130
  %v1197 = vpop.f32.mrb[0].mxu0
  %v1198 = vadd.f32 0.0, %v1197
  %v1199 = vpop.f32.mrb[0].mxu0
  %v1200 = vpop.f32.mrb[0].mxu0
  %v1201 = vadd.f32 0.0, %v1200
  %v1202 = vpop.f32.mrb[0].mxu0
  %1203 = vmatprep.mubr.bf16.mxu0 0
  %1204 = vmatmul.mubr.bf16.gmra.mrb[0].mxu0 %v1133
  %v1205 = vpop.f32.mrb[0].mxu0
  %v1206 = vadd.f32 0.0, %v1205
  %v1207 = vpop.f32.mrb[0].mxu0
  %v1208 = vpop.f32.mrb[0].mxu0
  %v1209 = vadd.f32 0.0, %v1208
  %v1210 = vpop.f32.mrb[0].mxu0
  %1211 = vmatprep.mubr.bf16.mxu0 0
  %1212 = vmatmul.mubr.bf16.gmra.mrb[0].mxu0 %v1136
  %v1213 = vpop.f32.mrb[0].mxu0
  %v1214 = vadd.f32 0.0, %v1213
  %v1215 = vpop.f32.mrb[0].mxu0
  %v1216 = vpop.f32.mrb[0].mxu0
  %v1217 = vadd.f32 0.0, %v1216
  %v1218 = vpop.f32.mrb[0].mxu0
  %1219 = vmatprep.mubr.bf16.mxu0 0
  %1220 = vmatmul.mubr.bf16.gmra.mrb[0].mxu0 %v1139
  %v1221 = vpop.f32.mrb[0].mxu0
  %v1222 = vadd.f32 0.0, %v1221
  %v1223 = vpop.f32.mrb[0].mxu0
  %v1224 = vpop.f32.mrb[0].mxu0
  %v1225 = vadd.f32 0.0, %v1224
  %v1226 = vpop.f32.mrb[0].mxu0
  %1227 = vmatprep.mubr.bf16.mxu0 0
  %1228 = vmatmul.mubr.bf16.gmra.mrb[0].mxu0 %v1142
  %v1229 = vpop.f32.mrb[0].mxu0
  %v1230 = vadd.f32 0.0, %v1229
  %v1231 = vpop.f32.mrb[0].mxu0
  %v1232 = vpop.f32.mrb[0].mxu0
  %v1233 = vadd.f32 0.0, %v1232
  %v1234 = vpop.f32.mrb[0].mxu0
  %1235 = vmatprep.mubr.bf16.mxu0 0
  %1236 = vmatmul.mubr.bf16.gmra.mrb[0].mxu0 %v1145
  %v1237 = vpop.f32.mrb[0].mxu0
  %v1238 = vadd.f32 0.0, %v1237
  %v1239 = vpop.f32.mrb[0].mxu0
  %v1240 = vpop.f32.mrb[0].mxu0
  %v1241 = vadd.f32 0.0, %v1240
  %v1242 = vpop.f32.mrb[0].mxu0
  %1243 = vdwg.mxu0
  %1245 = vset.pattern.permute.xlu0 0
  %1246 = vperm.xlu0 %1245, %v92
  %v1247 = vpop.permute.xlu0 %1246
  %1250 = vset.pattern.permute.xlu0 0
  %1251 = vperm.xlu0 %1250, %v93
  %v1252 = vpop.permute.xlu0 %1251
  %1255 = vset.pattern.permute.xlu0 0
  %1256 = vperm.xlu0 %1255, %v94
  %v1257 = vpop.permute.xlu0 %1256
  %1260 = vset.pattern.permute.xlu0 0
  %1261 = vperm.xlu0 %1260, %v95
  %v1262 = vpop.permute.xlu0 %1261
  %1265 = vset.pattern.permute.xlu0 0
  %1266 = vperm.xlu0 %1265, %v96
  %v1267 = vpop.permute.xlu0 %1266
  %1270 = vset.pattern.permute.xlu0 0
  %1271 = vperm.xlu0 %1270, %v97
  %v1272 = vpop.permute.xlu0 %1271
  %1275 = vset.pattern.permute.xlu0 0
  %1276 = vperm.xlu0 %1275, %v98
  %v1277 = vpop.permute.xlu0 %1276
  %1280 = vset.pattern.permute.xlu0 0
  %1281 = vperm.xlu0 %1280, %v99
  %v1282 = vpop.permute.xlu0 %1281
  %1285 = vset.pattern.permute.xlu0 0
  %1286 = vperm.xlu0 %1285, %v100
  %v1287 = vpop.permute.xlu0 %1286
  %1290 = vset.pattern.permute.xlu0 0
  %1291 = vperm.xlu0 %1290, %v101
  %v1292 = vpop.permute.xlu0 %1291
  %1295 = vset.pattern.permute.xlu0 0
  %1296 = vperm.xlu0 %1295, %v102
  %v1297 = vpop.permute.xlu0 %1296
  %1300 = vset.pattern.permute.xlu0 0
  %1301 = vperm.xlu0 %1300, %v103
  %v1302 = vpop.permute.xlu0 %1301
  %1305 = vset.pattern.permute.xlu0 0
  %1306 = vperm.xlu0 %1305, %v104
  %v1307 = vpop.permute.xlu0 %1306
  %1310 = vset.pattern.permute.xlu0 0
  %1311 = vperm.xlu0 %1310, %v105
  %v1312 = vpop.permute.xlu0 %1311
  %1315 = vset.pattern.permute.xlu0 0
  %1316 = vperm.xlu0 %1315, %v106
  %v1317 = vpop.permute.xlu0 %1316
  %1320 = vset.pattern.permute.xlu0 0
  %1321 = vperm.xlu0 %1320, %v107
  %v1322 = vpop.permute.xlu0 %1321
  %v1324 = vmul.f32 %v1182, %v1247
  %v1325 = vmul.f32 %v1185, %v1252
  %v1326 = vmul.f32 %v1190, %v1257
  %v1327 = vmul.f32 %v1193, %v1262
  %v1328 = vmul.f32 %v1198, %v1267
  %v1329 = vmul.f32 %v1201, %v1272
  %v1330 = vmul.f32 %v1206, %v1277
  %v1331 = vmul.f32 %v1209, %v1282
  %v1332 = vmul.f32 %v1214, %v1287
  %v1333 = vmul.f32 %v1217, %v1292
  %v1334 = vmul.f32 %v1222, %v1297
  %v1335 = vmul.f32 %v1225, %v1302
  %v1336 = vmul.f32 %v1230, %v1307
  %v1337 = vmul.f32 %v1233, %v1312
  %v1338 = vmul.f32 %v1238, %v1317
  %v1339 = vmul.f32 %v1241, %v1322
  %1341 = vset.pattern.permute.xlu0 0
  %1342 = vperm.xlu0 %1341, %v108
  %v1343 = vpop.permute.xlu0 %1342
  %1346 = vset.pattern.permute.xlu0 0
  %1347 = vperm.xlu0 %1346, %v109
  %v1348 = vpop.permute.xlu0 %1347
  %1351 = vset.pattern.permute.xlu0 0
  %1352 = vperm.xlu0 %1351, %v110
  %v1353 = vpop.permute.xlu0 %1352
  %1356 = vset.pattern.permute.xlu0 0
  %1357 = vperm.xlu0 %1356, %v111
  %v1358 = vpop.permute.xlu0 %1357
  %1361 = vset.pattern.permute.xlu0 0
  %1362 = vperm.xlu0 %1361, %v112
  %v1363 = vpop.permute.xlu0 %1362
  %1366 = vset.pattern.permute.xlu0 0
  %1367 = vperm.xlu0 %1366, %v113
  %v1368 = vpop.permute.xlu0 %1367
  %1371 = vset.pattern.permute.xlu0 0
  %1372 = vperm.xlu0 %1371, %v114
  %v1373 = vpop.permute.xlu0 %1372
  %1376 = vset.pattern.permute.xlu0 0
  %1377 = vperm.xlu0 %1376, %v115
  %v1378 = vpop.permute.xlu0 %1377
  %1381 = vset.pattern.permute.xlu0 0
  %1382 = vperm.xlu0 %1381, %v116
  %v1383 = vpop.permute.xlu0 %1382
  %1386 = vset.pattern.permute.xlu0 0
  %1387 = vperm.xlu0 %1386, %v117
  %v1388 = vpop.permute.xlu0 %1387
  %1391 = vset.pattern.permute.xlu0 0
  %1392 = vperm.xlu0 %1391, %v118
  %v1393 = vpop.permute.xlu0 %1392
  %1396 = vset.pattern.permute.xlu0 0
  %1397 = vperm.xlu0 %1396, %v119
  %v1398 = vpop.permute.xlu0 %1397
  %1401 = vset.pattern.permute.xlu0 0
  %1402 = vperm.xlu0 %1401, %v120
  %v1403 = vpop.permute.xlu0 %1402
  %1406 = vset.pattern.permute.xlu0 0
  %1407 = vperm.xlu0 %1406, %v121
  %v1408 = vpop.permute.xlu0 %1407
  %1411 = vset.pattern.permute.xlu0 0
  %1412 = vperm.xlu0 %1411, %v122
  %v1413 = vpop.permute.xlu0 %1412
  %1416 = vset.pattern.permute.xlu0 0
  %1417 = vperm.xlu0 %1416, %v123
  %v1418 = vpop.permute.xlu0 %1417
  %v1420 = vadd.f32 %v1324, %v1343
  %v1421 = vadd.f32 %v1325, %v1348
  %v1422 = vadd.f32 %v1326, %v1353
  %v1423 = vadd.f32 %v1327, %v1358
  %v1424 = vadd.f32 %v1328, %v1363
  %v1425 = vadd.f32 %v1329, %v1368
  %v1426 = vadd.f32 %v1330, %v1373
  %v1427 = vadd.f32 %v1331, %v1378
  %v1428 = vadd.f32 %v1332, %v1383
  %v1429 = vadd.f32 %v1333, %v1388
  %v1430 = vadd.f32 %v1334, %v1393
  %v1431 = vadd.f32 %v1335, %v1398
  %v1432 = vadd.f32 %v1336, %v1403
  %v1433 = vadd.f32 %v1337, %v1408
  %v1434 = vadd.f32 %v1338, %v1413
  %v1435 = vadd.f32 %v1339, %v1418
  %1436 = vmatprep.subr.bf16.mxu0 0
  %1437 = vmatpush1.bf16.msra.mxu0 %v1000
  %1438 = vmatprep.subr.bf16.mxu0 0
  %1439 = vmatpush1.bf16.msra.mxu0 %v1001
  %1440 = vmatprep.subr.bf16.mxu0 0
  %1441 = vmatpush1.bf16.msra.mxu0 %v1002
  %1442 = vmatprep.subr.bf16.mxu0 0
  %1443 = vmatpush1.bf16.msra.mxu0 %v1003
  %1444 = vmatprep.subr.bf16.mxu0 0
  %1445 = vmatpush1.bf16.msra.mxu0 %v1004
  %1446 = vmatprep.subr.bf16.mxu0 0
  %1447 = vmatpush1.bf16.msra.mxu0 %v1005
  %1448 = vmatprep.subr.bf16.mxu0 0
  %1449 = vmatpush1.bf16.msra.mxu0 %v1006
  %1450 = vmatprep.subr.bf16.mxu0 0
  %1451 = vmatpush1.bf16.msra.mxu0 %v1007
  %1452 = vmatprep.subr.bf16.mxu0 0
  %1453 = vmatpush1.bf16.msra.mxu0 %v1008
  %1454 = vmatprep.subr.bf16.mxu0 0
  %1455 = vmatpush1.bf16.msra.mxu0 %v1009
  %1456 = vmatprep.subr.bf16.mxu0 0
  %1457 = vmatpush1.bf16.msra.mxu0 %v1010
  %1458 = vmatprep.subr.bf16.mxu0 0
  %1459 = vmatpush1.bf16.msra.mxu0 %v1011
  %1460 = vmatprep.subr.bf16.mxu0 0
  %1461 = vmatpush1.bf16.msra.mxu0 %v1012
  %1462 = vmatprep.subr.bf16.mxu0 0
  %1463 = vmatpush1.bf16.msra.mxu0 %v1013
  %1464 = vmatprep.subr.bf16.mxu0 0
  %1465 = vmatpush1.bf16.msra.mxu0 %v1014
  %1466 = vmatprep.subr.bf16.mxu0 0
  %1467 = vmatpush1.bf16.msra.mxu0 %v1015
  %1468 = vmatprep.mubr.bf16.mxu0 %v264
  %1469 = vmatmul.mubr.bf16.gmra.mrb[0].mxu0 %v263
  %v1470 = vpop.f32.mrb[0].mxu0
  %v1471 = vadd.f32 0.0, %v1470
  %v1472 = vpop.f32.mrb[0].mxu0
  %v1473 = vpop.f32.mrb[0].mxu0
  %v1474 = vadd.f32 0.0, %v1473
  %v1475 = vpop.f32.mrb[0].mxu0
  %1476 = vmatprep.mubr.bf16.mxu0 %v266
  %1477 = vmatmul.mubr.bf16.gmra.mrb[0].mxu0 %v265
  %v1478 = vpop.f32.mrb[0].mxu0
  %v1479 = vadd.f32 0.0, %v1478
  %v1480 = vpop.f32.mrb[0].mxu0
  %v1481 = vpop.f32.mrb[0].mxu0
  %v1482 = vadd.f32 0.0, %v1481
  %v1483 = vpop.f32.mrb[0].mxu0
  %1484 = vmatprep.mubr.bf16.mxu0 %v268
  %1485 = vmatmul.mubr.bf16.gmra.mrb[0].mxu0 %v267
  %v1486 = vpop.f32.mrb[0].mxu0
  %v1487 = vadd.f32 0.0, %v1486
  %v1488 = vpop.f32.mrb[0].mxu0
  %v1489 = vpop.f32.mrb[0].mxu0
  %v1490 = vadd.f32 0.0, %v1489
  %v1491 = vpop.f32.mrb[0].mxu0
  %1492 = vmatprep.mubr.bf16.mxu0 %v270
  %1493 = vmatmul.mubr.bf16.gmra.mrb[0].mxu0 %v269
  %v1494 = vpop.f32.mrb[0].mxu0
  %v1495 = vadd.f32 0.0, %v1494
  %v1496 = vpop.f32.mrb[0].mxu0
  %v1497 = vpop.f32.mrb[0].mxu0
  %v1498 = vadd.f32 0.0, %v1497
  %v1499 = vpop.f32.mrb[0].mxu0
  %1500 = vdwg.mxu0
  %v1501 = vpack.c.bf16 %v1474, %v1471
  %v1502 = vpack.c.bf16 %v1482, %v1479
  %v1503 = vpack.c.bf16 %v1490, %v1487
  %v1504 = vpack.c.bf16 %v1498, %v1495
  %v1521 = vunpack.c.l.b16 %v156
  %v1522 = vunpack.c.l.b16 %v157
  %v1523 = vunpack.c.l.b16 %v158
  %v1524 = vunpack.c.l.b16 %v159
  %v1525 = vunpack.c.l.b16 %v160
  %v1526 = vunpack.c.l.b16 %v161
  %v1527 = vunpack.c.l.b16 %v162
  %v1528 = vunpack.c.l.b16 %v163
  %v1529 = vunpack.c.l.b16 %v164
  %v1530 = vunpack.c.l.b16 %v165
  %v1531 = vunpack.c.l.b16 %v166
  %v1532 = vunpack.c.l.b16 %v167
  %v1533 = vunpack.c.l.b16 %v168
  %v1534 = vunpack.c.l.b16 %v169
  %v1535 = vunpack.c.l.b16 %v170
  %v1536 = vunpack.c.l.b16 %v171
  %v1537 = vpack.c.b16 %v1522, %v1521
  %v1538 = vpack.c.b16 %v1524, %v1523
  %v1539 = vpack.c.b16 %v1526, %v1525
  %v1540 = vpack.c.b16 %v1528, %v1527
  %v1541 = vpack.c.b16 %v1530, %v1529
  %v1542 = vpack.c.b16 %v1532, %v1531
  %v1543 = vpack.c.b16 %v1534, %v1533
  %v1544 = vpack.c.b16 %v1536, %v1535
  %v1546 = vsel %vm281, %v1537, 0
  %v1549 = vsel %vm281, %v1538, 0
  %v1552 = vsel %vm281, %v1539, 0
  %v1555 = vsel %vm281, %v1540, 0
  %v1558 = vsel %vm281, %v1541, 0
  %v1561 = vsel %vm281, %v1542, 0
  %v1564 = vsel %vm281, %v1543, 0
  %v1567 = vsel %vm281, %v1544, 0
  %1569 = vmatprep.subr.bf16.mxu0 0
  %1570 = vmatpush1.bf16.msra.mxu0 %v1501
  %1571 = vmatprep.subr.bf16.mxu0 0
  %1572 = vmatpush1.bf16.msra.mxu0 %v1502
  %1573 = vmatprep.subr.bf16.mxu0 0
  %1574 = vmatpush1.bf16.msra.mxu0 %v1503
  %1575 = vmatprep.subr.bf16.mxu0 0
  %1576 = vmatpush1.bf16.msra.mxu0 %v1504
  %1577 = vmatprep.subr.bf16.mxu0 0
  %1578 = vmatpush1.bf16.msra.mxu0 0
  %1579 = vmatprep.subr.bf16.mxu0 0
  %1580 = vmatpush1.bf16.msra.mxu0 0
  %1581 = vmatprep.subr.bf16.mxu0 0
  %1582 = vmatpush1.bf16.msra.mxu0 0
  %1583 = vmatprep.subr.bf16.mxu0 0
  %1584 = vmatpush1.bf16.msra.mxu0 0
  %1585 = vmatprep.subr.bf16.mxu0 0
  %1586 = vmatpush1.bf16.msra.mxu0 0
  %1587 = vmatprep.subr.bf16.mxu0 0
  %1588 = vmatpush1.bf16.msra.mxu0 0
  %1589 = vmatprep.subr.bf16.mxu0 0
  %1590 = vmatpush1.bf16.msra.mxu0 0
  %1591 = vmatprep.subr.bf16.mxu0 0
  %1592 = vmatpush1.bf16.msra.mxu0 0
  %1593 = vmatprep.subr.bf16.mxu0 0
  %1594 = vmatpush1.bf16.msra.mxu0 0
  %1595 = vmatprep.subr.bf16.mxu0 0
  %1596 = vmatpush1.bf16.msra.mxu0 0
  %1597 = vmatprep.subr.bf16.mxu0 0
  %1598 = vmatpush1.bf16.msra.mxu0 0
  %1599 = vmatprep.subr.bf16.mxu0 0
  %1600 = vmatpush1.bf16.msra.mxu0 0
  %1601 = vmatprep.mubr.bf16.mxu0 0
  %1602 = vmatmul.mubr.bf16.gmra.mrb[0].mxu0 %v1546
  %v1603 = vpop.f32.mrb[0].mxu0
  %v1604 = vadd.f32 0.0, %v1603
  %v1605 = vpop.f32.mrb[0].mxu0
  %v1606 = vpop.f32.mrb[0].mxu0
  %v1607 = vadd.f32 0.0, %v1606
  %v1608 = vpop.f32.mrb[0].mxu0
  %1609 = vmatprep.mubr.bf16.mxu0 0
  %1610 = vmatmul.mubr.bf16.gmra.mrb[0].mxu0 %v1549
  %v1611 = vpop.f32.mrb[0].mxu0
  %v1612 = vadd.f32 0.0, %v1611
  %v1613 = vpop.f32.mrb[0].mxu0
  %v1614 = vpop.f32.mrb[0].mxu0
  %v1615 = vadd.f32 0.0, %v1614
  %v1616 = vpop.f32.mrb[0].mxu0
  %1617 = vmatprep.mubr.bf16.mxu0 0
  %1618 = vmatmul.mubr.bf16.gmra.mrb[0].mxu0 %v1552
  %v1619 = vpop.f32.mrb[0].mxu0
  %v1620 = vadd.f32 0.0, %v1619
  %v1621 = vpop.f32.mrb[0].mxu0
  %v1622 = vpop.f32.mrb[0].mxu0
  %v1623 = vadd.f32 0.0, %v1622
  %v1624 = vpop.f32.mrb[0].mxu0
  %1625 = vmatprep.mubr.bf16.mxu0 0
  %1626 = vmatmul.mubr.bf16.gmra.mrb[0].mxu0 %v1555
  %v1627 = vpop.f32.mrb[0].mxu0
  %v1628 = vadd.f32 0.0, %v1627
  %v1629 = vpop.f32.mrb[0].mxu0
  %v1630 = vpop.f32.mrb[0].mxu0
  %v1631 = vadd.f32 0.0, %v1630
  %v1632 = vpop.f32.mrb[0].mxu0
  %1633 = vmatprep.mubr.bf16.mxu0 0
  %1634 = vmatmul.mubr.bf16.gmra.mrb[0].mxu0 %v1558
  %v1635 = vpop.f32.mrb[0].mxu0
  %v1636 = vadd.f32 0.0, %v1635
  %v1637 = vpop.f32.mrb[0].mxu0
  %v1638 = vpop.f32.mrb[0].mxu0
  %v1639 = vadd.f32 0.0, %v1638
  %v1640 = vpop.f32.mrb[0].mxu0
  %1641 = vmatprep.mubr.bf16.mxu0 0
  %1642 = vmatmul.mubr.bf16.gmra.mrb[0].mxu0 %v1561
  %v1643 = vpop.f32.mrb[0].mxu0
  %v1644 = vadd.f32 0.0, %v1643
  %v1645 = vpop.f32.mrb[0].mxu0
  %v1646 = vpop.f32.mrb[0].mxu0
  %v1647 = vadd.f32 0.0, %v1646
  %v1648 = vpop.f32.mrb[0].mxu0
  %1649 = vmatprep.mubr.bf16.mxu0 0
  %1650 = vmatmul.mubr.bf16.gmra.mrb[0].mxu0 %v1564
  %v1651 = vpop.f32.mrb[0].mxu0
  %v1652 = vadd.f32 0.0, %v1651
  %v1653 = vpop.f32.mrb[0].mxu0
  %v1654 = vpop.f32.mrb[0].mxu0
  %v1655 = vadd.f32 0.0, %v1654
  %v1656 = vpop.f32.mrb[0].mxu0
  %1657 = vmatprep.mubr.bf16.mxu0 0
  %1658 = vmatmul.mubr.bf16.gmra.mrb[0].mxu0 %v1567
  %v1659 = vpop.f32.mrb[0].mxu0
  %v1660 = vadd.f32 0.0, %v1659
  %v1661 = vpop.f32.mrb[0].mxu0
  %v1662 = vpop.f32.mrb[0].mxu0
  %v1663 = vadd.f32 0.0, %v1662
  %v1664 = vpop.f32.mrb[0].mxu0
  %1665 = vdwg.mxu0
  %1667 = vset.pattern.permute.xlu0 0
  %1668 = vperm.xlu0 %1667, %v172
  %v1669 = vpop.permute.xlu0 %1668
  %1672 = vset.pattern.permute.xlu0 0
  %1673 = vperm.xlu0 %1672, %v173
  %v1674 = vpop.permute.xlu0 %1673
  %1677 = vset.pattern.permute.xlu0 0
  %1678 = vperm.xlu0 %1677, %v174
  %v1679 = vpop.permute.xlu0 %1678
  %1682 = vset.pattern.permute.xlu0 0
  %1683 = vperm.xlu0 %1682, %v175
  %v1684 = vpop.permute.xlu0 %1683
  %1687 = vset.pattern.permute.xlu0 0
  %1688 = vperm.xlu0 %1687, %v176
  %v1689 = vpop.permute.xlu0 %1688
  %1692 = vset.pattern.permute.xlu0 0
  %1693 = vperm.xlu0 %1692, %v177
  %v1694 = vpop.permute.xlu0 %1693
  %1697 = vset.pattern.permute.xlu0 0
  %1698 = vperm.xlu0 %1697, %v178
  %v1699 = vpop.permute.xlu0 %1698
  %1702 = vset.pattern.permute.xlu0 0
  %1703 = vperm.xlu0 %1702, %v179
  %v1704 = vpop.permute.xlu0 %1703
  %1707 = vset.pattern.permute.xlu0 0
  %1708 = vperm.xlu0 %1707, %v180
  %v1709 = vpop.permute.xlu0 %1708
  %1712 = vset.pattern.permute.xlu0 0
  %1713 = vperm.xlu0 %1712, %v181
  %v1714 = vpop.permute.xlu0 %1713
  %1717 = vset.pattern.permute.xlu0 0
  %1718 = vperm.xlu0 %1717, %v182
  %v1719 = vpop.permute.xlu0 %1718
  %1722 = vset.pattern.permute.xlu0 0
  %1723 = vperm.xlu0 %1722, %v183
  %v1724 = vpop.permute.xlu0 %1723
  %1727 = vset.pattern.permute.xlu0 0
  %1728 = vperm.xlu0 %1727, %v184
  %v1729 = vpop.permute.xlu0 %1728
  %1732 = vset.pattern.permute.xlu0 0
  %1733 = vperm.xlu0 %1732, %v185
  %v1734 = vpop.permute.xlu0 %1733
  %1737 = vset.pattern.permute.xlu0 0
  %1738 = vperm.xlu0 %1737, %v186
  %v1739 = vpop.permute.xlu0 %1738
  %1742 = vset.pattern.permute.xlu0 0
  %1743 = vperm.xlu0 %1742, %v187
  %v1744 = vpop.permute.xlu0 %1743
  %v1746 = vmul.f32 %v1604, %v1669
  %v1747 = vmul.f32 %v1607, %v1674
  %v1748 = vmul.f32 %v1612, %v1679
  %v1749 = vmul.f32 %v1615, %v1684
  %v1750 = vmul.f32 %v1620, %v1689
  %v1751 = vmul.f32 %v1623, %v1694
  %v1752 = vmul.f32 %v1628, %v1699
  %v1753 = vmul.f32 %v1631, %v1704
  %v1754 = vmul.f32 %v1636, %v1709
  %v1755 = vmul.f32 %v1639, %v1714
  %v1756 = vmul.f32 %v1644, %v1719
  %v1757 = vmul.f32 %v1647, %v1724
  %v1758 = vmul.f32 %v1652, %v1729
  %v1759 = vmul.f32 %v1655, %v1734
  %v1760 = vmul.f32 %v1660, %v1739
  %v1761 = vmul.f32 %v1663, %v1744
  %1763 = vset.pattern.permute.xlu0 0
  %1764 = vperm.xlu0 %1763, %v188
  %v1765 = vpop.permute.xlu0 %1764
  %1768 = vset.pattern.permute.xlu0 0
  %1769 = vperm.xlu0 %1768, %v189
  %v1770 = vpop.permute.xlu0 %1769
  %1773 = vset.pattern.permute.xlu0 0
  %1774 = vperm.xlu0 %1773, %v190
  %v1775 = vpop.permute.xlu0 %1774
  %1778 = vset.pattern.permute.xlu0 0
  %1779 = vperm.xlu0 %1778, %v191
  %v1780 = vpop.permute.xlu0 %1779
  %1783 = vset.pattern.permute.xlu0 0
  %1784 = vperm.xlu0 %1783, %v192
  %v1785 = vpop.permute.xlu0 %1784
  %1788 = vset.pattern.permute.xlu0 0
  %1789 = vperm.xlu0 %1788, %v193
  %v1790 = vpop.permute.xlu0 %1789
  %1793 = vset.pattern.permute.xlu0 0
  %1794 = vperm.xlu0 %1793, %v194
  %v1795 = vpop.permute.xlu0 %1794
  %1798 = vset.pattern.permute.xlu0 0
  %1799 = vperm.xlu0 %1798, %v195
  %v1800 = vpop.permute.xlu0 %1799
  %1803 = vset.pattern.permute.xlu0 0
  %1804 = vperm.xlu0 %1803, %v196
  %v1805 = vpop.permute.xlu0 %1804
  %1808 = vset.pattern.permute.xlu0 0
  %1809 = vperm.xlu0 %1808, %v197
  %v1810 = vpop.permute.xlu0 %1809
  %1813 = vset.pattern.permute.xlu0 0
  %1814 = vperm.xlu0 %1813, %v198
  %v1815 = vpop.permute.xlu0 %1814
  %1818 = vset.pattern.permute.xlu0 0
  %1819 = vperm.xlu0 %1818, %v199
  %v1820 = vpop.permute.xlu0 %1819
  %1823 = vset.pattern.permute.xlu0 0
  %1824 = vperm.xlu0 %1823, %v200
  %v1825 = vpop.permute.xlu0 %1824
  %1828 = vset.pattern.permute.xlu0 0
  %1829 = vperm.xlu0 %1828, %v201
  %v1830 = vpop.permute.xlu0 %1829
  %1833 = vset.pattern.permute.xlu0 0
  %1834 = vperm.xlu0 %1833, %v202
  %v1835 = vpop.permute.xlu0 %1834
  %1838 = vset.pattern.permute.xlu0 0
  %1839 = vperm.xlu0 %1838, %v203
  %v1840 = vpop.permute.xlu0 %1839
  %v1842 = vadd.f32 %v1746, %v1765
  %v1843 = vadd.f32 %v1747, %v1770
  %v1844 = vadd.f32 %v1748, %v1775
  %v1845 = vadd.f32 %v1749, %v1780
  %v1846 = vadd.f32 %v1750, %v1785
  %v1847 = vadd.f32 %v1751, %v1790
  %v1848 = vadd.f32 %v1752, %v1795
  %v1849 = vadd.f32 %v1753, %v1800
  %v1850 = vadd.f32 %v1754, %v1805
  %v1851 = vadd.f32 %v1755, %v1810
  %v1852 = vadd.f32 %v1756, %v1815
  %v1853 = vadd.f32 %v1757, %v1820
  %v1854 = vadd.f32 %v1758, %v1825
  %v1855 = vadd.f32 %v1759, %v1830
  %v1856 = vadd.f32 %v1760, %v1835
  %v1857 = vadd.f32 %v1761, %v1840
  %v1858 = vadd.f32 %v1420, %v1842
  %v1859 = vadd.f32 %v1421, %v1843
  %v1860 = vadd.f32 %v1422, %v1844
  %v1861 = vadd.f32 %v1423, %v1845
  %v1862 = vadd.f32 %v1424, %v1846
  %v1863 = vadd.f32 %v1425, %v1847
  %v1864 = vadd.f32 %v1426, %v1848
  %v1865 = vadd.f32 %v1427, %v1849
  %v1866 = vadd.f32 %v1428, %v1850
  %v1867 = vadd.f32 %v1429, %v1851
  %v1868 = vadd.f32 %v1430, %v1852
  %v1869 = vadd.f32 %v1431, %v1853
  %v1870 = vadd.f32 %v1432, %v1854
  %v1871 = vadd.f32 %v1433, %v1855
  %v1872 = vadd.f32 %v1434, %v1856
  %v1873 = vadd.f32 %v1435, %v1857
  %v1874 = vmax.f32 %v1858, 0.0
  %v1875 = vmax.f32 %v1859, 0.0
  %v1876 = vmax.f32 %v1860, 0.0
  %v1877 = vmax.f32 %v1861, 0.0
  %v1878 = vmax.f32 %v1862, 0.0
  %v1879 = vmax.f32 %v1863, 0.0
  %v1880 = vmax.f32 %v1864, 0.0
  %v1881 = vmax.f32 %v1865, 0.0
  %v1882 = vmax.f32 %v1866, 0.0
  %v1883 = vmax.f32 %v1867, 0.0
  %v1884 = vmax.f32 %v1868, 0.0
  %v1885 = vmax.f32 %v1869, 0.0
  %v1886 = vmax.f32 %v1870, 0.0
  %v1887 = vmax.f32 %v1871, 0.0
  %v1888 = vmax.f32 %v1872, 0.0
  %v1889 = vmax.f32 %v1873, 0.0
  %1890 = vst.msk [vmem:[%s14] sm:$0xff] %vm281, %v1874
  %1891 = vst.msk [vmem:[%s14 + $0x8] sm:$0xff] %vm281, %v1875
  %1892 = vst.msk [vmem:[%s14 + $0x10] sm:$0xff] %vm281, %v1876
  %1893 = vst.msk [vmem:[%s14 + $0x18] sm:$0xff] %vm281, %v1877
  %1894 = vst.msk [vmem:[%s14 + $0x20] sm:$0xff] %vm281, %v1878
  %1895 = vst.msk [vmem:[%s14 + $0x28] sm:$0xff] %vm281, %v1879
  %1896 = vst.msk [vmem:[%s14 + $0x30] sm:$0xff] %vm281, %v1880
  %1897 = vst.msk [vmem:[%s14 + $0x38] sm:$0xff] %vm281, %v1881
  %1898 = vst.msk [vmem:[%s14 + $0x40] sm:$0xff] %vm281, %v1882
  %1899 = vst.msk [vmem:[%s14 + $0x48] sm:$0xff] %vm281, %v1883
  %1900 = vst.msk [vmem:[%s14 + $0x50] sm:$0xff] %vm281, %v1884
  %1901 = vst.msk [vmem:[%s14 + $0x58] sm:$0xff] %vm281, %v1885
  %1902 = vst.msk [vmem:[%s14 + $0x60] sm:$0xff] %vm281, %v1886
  %1903 = vst.msk [vmem:[%s14 + $0x68] sm:$0xff] %vm281, %v1887
  %1904 = vst.msk [vmem:[%s14 + $0x70] sm:$0xff] %vm281, %v1888
  %1905 = vst.msk [vmem:[%s14 + $0x78] sm:$0xff] %vm281, %v1889
  %s1906 = scalar_lea.vmem %s0, 128
  %v1907 = vld [vmem:[%s1906] sm:$0xff]
  %v1908 = vld [vmem:[%s1906 + $0x8] sm:$0xff]
  %v1909 = vld [vmem:[%s1906 + $0x10] sm:$0xff]
  %v1910 = vld [vmem:[%s1906 + $0x18] sm:$0xff]
  %v1911 = vld [vmem:[%s1906 + $0x20] sm:$0xff]
  %v1912 = vld [vmem:[%s1906 + $0x28] sm:$0xff]
  %v1913 = vld [vmem:[%s1906 + $0x30] sm:$0xff]
  %v1914 = vld [vmem:[%s1906 + $0x38] sm:$0xff]
  %v1915 = vld [vmem:[%s1906 + $0x40] sm:$0xff]
  %v1916 = vld [vmem:[%s1906 + $0x48] sm:$0xff]
  %v1917 = vld [vmem:[%s1906 + $0x50] sm:$0xff]
  %v1918 = vld [vmem:[%s1906 + $0x58] sm:$0xff]
  %v1919 = vld [vmem:[%s1906 + $0x60] sm:$0xff]
  %v1920 = vld [vmem:[%s1906 + $0x68] sm:$0xff]
  %v1921 = vld [vmem:[%s1906 + $0x70] sm:$0xff]
  %v1922 = vld [vmem:[%s1906 + $0x78] sm:$0xff]
  %v1923 = vpack.c.bf16 %v1909, %v1907
  %v1924 = vpack.c.bf16 %v1910, %v1908
  %v1925 = vpack.c.bf16 %v1913, %v1911
  %v1926 = vpack.c.bf16 %v1914, %v1912
  %v1927 = vpack.c.bf16 %v1917, %v1915
  %v1928 = vpack.c.bf16 %v1918, %v1916
  %v1929 = vpack.c.bf16 %v1921, %v1919
  %v1930 = vpack.c.bf16 %v1922, %v1920
  %1931 = vmatprep.subr.bf16.mxu0 %v1924
  %1932 = vmatpush1.bf16.msra.mxu0 %v1923
  %1933 = vmatprep.subr.bf16.mxu0 %v1926
  %1934 = vmatpush1.bf16.msra.mxu0 %v1925
  %1935 = vmatprep.subr.bf16.mxu0 %v1928
  %1936 = vmatpush1.bf16.msra.mxu0 %v1927
  %1937 = vmatprep.subr.bf16.mxu0 %v1930
  %1938 = vmatpush1.bf16.msra.mxu0 %v1929
  %1939 = vmatprep.subr.bf16.mxu0 0
  %1940 = vmatpush1.bf16.msra.mxu0 0
  %1941 = vmatprep.subr.bf16.mxu0 0
  %1942 = vmatpush1.bf16.msra.mxu0 0
  %1943 = vmatprep.subr.bf16.mxu0 0
  %1944 = vmatpush1.bf16.msra.mxu0 0
  %1945 = vmatprep.subr.bf16.mxu0 0
  %1946 = vmatpush1.bf16.msra.mxu0 0
  %1947 = vmatprep.subr.bf16.mxu0 0
  %1948 = vmatpush1.bf16.msra.mxu0 0
  %1949 = vmatprep.subr.bf16.mxu0 0
  %1950 = vmatpush1.bf16.msra.mxu0 0
  %1951 = vmatprep.subr.bf16.mxu0 0
  %1952 = vmatpush1.bf16.msra.mxu0 0
  %1953 = vmatprep.subr.bf16.mxu0 0
  %1954 = vmatpush1.bf16.msra.mxu0 0
  %1955 = vmatprep.subr.bf16.mxu0 0
  %1956 = vmatpush1.bf16.msra.mxu0 0
  %1957 = vmatprep.subr.bf16.mxu0 0
  %1958 = vmatpush1.bf16.msra.mxu0 0
  %1959 = vmatprep.subr.bf16.mxu0 0
  %1960 = vmatpush1.bf16.msra.mxu0 0
  %1961 = vmatprep.subr.bf16.mxu0 0
  %1962 = vmatpush1.bf16.msra.mxu0 0
  %1963 = vmatprep.mubr.bf16.mxu0 0
  %1964 = vmatmul.mubr.bf16.gmra.mrb[0].mxu0 %v283
  %v1965 = vpop.f32.mrb[0].mxu0
  %v1966 = vadd.f32 0.0, %v1965
  %v1967 = vpop.f32.mrb[0].mxu0
  %v1968 = vadd.f32 0.0, %v1967
  %v1969 = vpop.f32.mrb[0].mxu0
  %v1970 = vadd.f32 0.0, %v1969
  %v1971 = vpop.f32.mrb[0].mxu0
  %v1972 = vadd.f32 0.0, %v1971
  %1973 = vmatprep.mubr.bf16.mxu0 0
  %1974 = vmatmul.mubr.bf16.gmra.mrb[0].mxu0 %v286
  %v1975 = vpop.f32.mrb[0].mxu0
  %v1976 = vadd.f32 0.0, %v1975
  %v1977 = vpop.f32.mrb[0].mxu0
  %v1978 = vadd.f32 0.0, %v1977
  %v1979 = vpop.f32.mrb[0].mxu0
  %v1980 = vadd.f32 0.0, %v1979
  %v1981 = vpop.f32.mrb[0].mxu0
  %v1982 = vadd.f32 0.0, %v1981
  %1983 = vdwg.mxu0
  %v1984 = vmul.f32 %v1966, %v344
  %v1985 = vmul.f32 %v1968, %v344
  %v1986 = vmul.f32 %v1970, %v349
  %v1987 = vmul.f32 %v1972, %v349
  %v1988 = vmul.f32 %v1976, %v354
  %v1989 = vmul.f32 %v1978, %v354
  %v1990 = vmul.f32 %v1980, %v359
  %v1991 = vmul.f32 %v1982, %v359
  %v1992 = vadd.f32 %v1984, %v372
  %v1993 = vadd.f32 %v1985, %v372
  %v1994 = vadd.f32 %v1986, %v377
  %v1995 = vadd.f32 %v1987, %v377
  %v1996 = vadd.f32 %v1988, %v382
  %v1997 = vadd.f32 %v1989, %v382
  %v1998 = vadd.f32 %v1990, %v387
  %v1999 = vadd.f32 %v1991, %v387
  %v2000 = vmax.f32 %v1992, 0.0
  %v2001 = vmax.f32 %v1993, 0.0
  %v2002 = vmax.f32 %v1994, 0.0
  %v2003 = vmax.f32 %v1995, 0.0
  %v2004 = vmax.f32 %v1996, 0.0
  %v2005 = vmax.f32 %v1997, 0.0
  %v2006 = vmax.f32 %v1998, 0.0
  %v2007 = vmax.f32 %v1999, 0.0
  %v2008 = vpack.c.bf16 %v2002, %v2000
  %v2009 = vpack.c.bf16 %v2003, %v2001
  %v2010 = vpack.c.bf16 %v2006, %v2004
  %v2011 = vpack.c.bf16 %v2007, %v2005
  %2016 = vrot.lane.b32.xlu0 %v2008, 17
  %v2017 = vpop.permute.xlu0 %2016
  %2018 = vrot.lane.b32.xlu0 %v2009, 17
  %v2019 = vpop.permute.xlu0 %2018
  %2020 = vrot.lane.b32.xlu0 %v2010, 17
  %v2021 = vpop.permute.xlu0 %2020
  %2022 = vrot.lane.b32.xlu0 %v2011, 17
  %v2023 = vpop.permute.xlu0 %2022
  %v2024 = vsel %vm421, %v2017, %v2019
  %v2025 = vsel %vm421, %v2021, %v2023
  %v2029 = vsel %vm426, 0, %v2017
  %v2032 = vsel %vm426, 0, %v2021
  %v2035 = vsel %vm426, %v2019, 0
  %v2038 = vsel %vm426, %v2023, 0
  %v2040 = vmul.bf16 %v2029, %v237
  %v2041 = vmul.bf16 %v2024, %v238
  %v2042 = vmul.bf16 %v2032, %v237
  %v2043 = vmul.bf16 %v2025, %v238
  %v2044 = vmul.bf16 %v2029, %v447
  %v2045 = vmul.bf16 %v2024, %v451
  %v2046 = vmul.bf16 %v2035, %v449
  %v2047 = vmul.bf16 %v2032, %v447
  %v2048 = vmul.bf16 %v2025, %v451
  %v2049 = vmul.bf16 %v2038, %v449
  %v2050 = vmul.bf16 %v2029, %v464
  %v2051 = vmul.bf16 %v2024, %v468
  %v2052 = vmul.bf16 %v2035, %v466
  %v2053 = vmul.bf16 %v2032, %v464
  %v2054 = vmul.bf16 %v2025, %v468
  %v2055 = vmul.bf16 %v2038, %v466
  %v2056 = vmul.bf16 %v2029, %v479
  %v2057 = vmul.bf16 %v2024, %v483
  %v2058 = vmul.bf16 %v2035, %v481
  %v2059 = vmul.bf16 %v2032, %v479
  %v2060 = vmul.bf16 %v2025, %v483
  %v2061 = vmul.bf16 %v2038, %v481
  %v2062 = vmul.bf16 %v2029, %v494
  %v2063 = vmul.bf16 %v2024, %v498
  %v2064 = vmul.bf16 %v2035, %v496
  %v2065 = vmul.bf16 %v2032, %v494
  %v2066 = vmul.bf16 %v2025, %v498
  %v2067 = vmul.bf16 %v2038, %v496
  %v2068 = vmul.bf16 %v2029, %v509
  %v2069 = vmul.bf16 %v2024, %v513
  %v2070 = vmul.bf16 %v2035, %v511
  %v2071 = vmul.bf16 %v2032, %v509
  %v2072 = vmul.bf16 %v2025, %v513
  %v2073 = vmul.bf16 %v2038, %v511
  %2078 = vrot.lane.b32.xlu0 %v2029, 127
  %v2079 = vpop.permute.xlu0 %2078
  %2080 = vrot.lane.b32.xlu0 %v2024, 127
  %v2081 = vpop.permute.xlu0 %2080
  %2082 = vrot.lane.b32.xlu0 %v2035, 127
  %v2083 = vpop.permute.xlu0 %2082
  %2084 = vrot.lane.b32.xlu0 %v2032, 127
  %v2085 = vpop.permute.xlu0 %2084
  %2086 = vrot.lane.b32.xlu0 %v2025, 127
  %v2087 = vpop.permute.xlu0 %2086
  %2088 = vrot.lane.b32.xlu0 %v2038, 127
  %v2089 = vpop.permute.xlu0 %2088
  %v2090 = vsel %vm539, %v2079, %v2081
  %v2091 = vsel %vm539, %v2081, %v2083
  %v2092 = vsel %vm539, %v2085, %v2087
  %v2093 = vsel %vm539, %v2087, %v2089
  %2104 = vrot.lane.b32.xlu0 %v2044, 126
  %v2105 = vpop.permute.xlu0 %2104
  %2106 = vrot.lane.b32.xlu0 %v2045, 126
  %v2107 = vpop.permute.xlu0 %2106
  %2108 = vrot.lane.b32.xlu0 %v2046, 126
  %v2109 = vpop.permute.xlu0 %2108
  %2110 = vrot.lane.b32.xlu0 %v2047, 126
  %v2111 = vpop.permute.xlu0 %2110
  %2112 = vrot.lane.b32.xlu0 %v2048, 126
  %v2113 = vpop.permute.xlu0 %2112
  %2114 = vrot.lane.b32.xlu0 %v2049, 126
  %v2115 = vpop.permute.xlu0 %2114
  %v2116 = vsel %vm566, %v2105, %v2107
  %v2117 = vsel %vm566, %v2107, %v2109
  %v2118 = vsel %vm566, %v2111, %v2113
  %v2119 = vsel %vm566, %v2113, %v2115
  %2130 = vrot.lane.b32.xlu0 %v2050, 112
  %v2131 = vpop.permute.xlu0 %2130
  %2132 = vrot.lane.b32.xlu0 %v2051, 112
  %v2133 = vpop.permute.xlu0 %2132
  %2134 = vrot.lane.b32.xlu0 %v2052, 112
  %v2135 = vpop.permute.xlu0 %2134
  %2136 = vrot.lane.b32.xlu0 %v2053, 112
  %v2137 = vpop.permute.xlu0 %2136
  %2138 = vrot.lane.b32.xlu0 %v2054, 112
  %v2139 = vpop.permute.xlu0 %2138
  %2140 = vrot.lane.b32.xlu0 %v2055, 112
  %v2141 = vpop.permute.xlu0 %2140
  %v2142 = vsel %vm593, %v2131, %v2133
  %v2143 = vsel %vm593, %v2133, %v2135
  %v2144 = vsel %vm593, %v2137, %v2139
  %v2145 = vsel %vm593, %v2139, %v2141
  %2150 = vrot.lane.b32.xlu0 %v2029, 111
  %v2151 = vpop.permute.xlu0 %2150
  %2152 = vrot.lane.b32.xlu0 %v2024, 111
  %v2153 = vpop.permute.xlu0 %2152
  %2154 = vrot.lane.b32.xlu0 %v2035, 111
  %v2155 = vpop.permute.xlu0 %2154
  %2156 = vrot.lane.b32.xlu0 %v2032, 111
  %v2157 = vpop.permute.xlu0 %2156
  %2158 = vrot.lane.b32.xlu0 %v2025, 111
  %v2159 = vpop.permute.xlu0 %2158
  %2160 = vrot.lane.b32.xlu0 %v2038, 111
  %v2161 = vpop.permute.xlu0 %2160
  %v2162 = vsel %vm614, %v2151, %v2153
  %v2163 = vsel %vm614, %v2153, %v2155
  %v2164 = vsel %vm614, %v2157, %v2159
  %v2165 = vsel %vm614, %v2159, %v2161
  %2176 = vrot.lane.b32.xlu0 %v2056, 110
  %v2177 = vpop.permute.xlu0 %2176
  %2178 = vrot.lane.b32.xlu0 %v2057, 110
  %v2179 = vpop.permute.xlu0 %2178
  %2180 = vrot.lane.b32.xlu0 %v2058, 110
  %v2181 = vpop.permute.xlu0 %2180
  %2182 = vrot.lane.b32.xlu0 %v2059, 110
  %v2183 = vpop.permute.xlu0 %2182
  %2184 = vrot.lane.b32.xlu0 %v2060, 110
  %v2185 = vpop.permute.xlu0 %2184
  %2186 = vrot.lane.b32.xlu0 %v2061, 110
  %v2187 = vpop.permute.xlu0 %2186
  %v2188 = vsel %vm641, %v2177, %v2179
  %v2189 = vsel %vm641, %v2179, %v2181
  %v2190 = vsel %vm641, %v2183, %v2185
  %v2191 = vsel %vm641, %v2185, %v2187
  %2202 = vrot.lane.b32.xlu0 %v2062, 96
  %v2203 = vpop.permute.xlu0 %2202
  %2204 = vrot.lane.b32.xlu0 %v2063, 96
  %v2205 = vpop.permute.xlu0 %2204
  %2206 = vrot.lane.b32.xlu0 %v2064, 96
  %v2207 = vpop.permute.xlu0 %2206
  %2208 = vrot.lane.b32.xlu0 %v2065, 96
  %v2209 = vpop.permute.xlu0 %2208
  %2210 = vrot.lane.b32.xlu0 %v2066, 96
  %v2211 = vpop.permute.xlu0 %2210
  %2212 = vrot.lane.b32.xlu0 %v2067, 96
  %v2213 = vpop.permute.xlu0 %2212
  %v2214 = vsel %vm668, %v2203, %v2205
  %v2215 = vsel %vm668, %v2205, %v2207
  %v2216 = vsel %vm668, %v2209, %v2211
  %v2217 = vsel %vm668, %v2211, %v2213
  %2222 = vrot.lane.b32.xlu0 %v2029, 95
  %v2223 = vpop.permute.xlu0 %2222
  %2224 = vrot.lane.b32.xlu0 %v2024, 95
  %v2225 = vpop.permute.xlu0 %2224
  %2226 = vrot.lane.b32.xlu0 %v2035, 95
  %v2227 = vpop.permute.xlu0 %2226
  %2228 = vrot.lane.b32.xlu0 %v2032, 95
  %v2229 = vpop.permute.xlu0 %2228
  %2230 = vrot.lane.b32.xlu0 %v2025, 95
  %v2231 = vpop.permute.xlu0 %2230
  %2232 = vrot.lane.b32.xlu0 %v2038, 95
  %v2233 = vpop.permute.xlu0 %2232
  %v2234 = vsel %vm689, %v2223, %v2225
  %v2235 = vsel %vm689, %v2225, %v2227
  %v2236 = vsel %vm689, %v2229, %v2231
  %v2237 = vsel %vm689, %v2231, %v2233
  %2248 = vrot.lane.b32.xlu0 %v2068, 94
  %v2249 = vpop.permute.xlu0 %2248
  %2250 = vrot.lane.b32.xlu0 %v2069, 94
  %v2251 = vpop.permute.xlu0 %2250
  %2252 = vrot.lane.b32.xlu0 %v2070, 94
  %v2253 = vpop.permute.xlu0 %2252
  %2254 = vrot.lane.b32.xlu0 %v2071, 94
  %v2255 = vpop.permute.xlu0 %2254
  %2256 = vrot.lane.b32.xlu0 %v2072, 94
  %v2257 = vpop.permute.xlu0 %2256
  %2258 = vrot.lane.b32.xlu0 %v2073, 94
  %v2259 = vpop.permute.xlu0 %2258
  %v2260 = vsel %vm716, %v2249, %v2251
  %v2261 = vsel %vm716, %v2251, %v2253
  %v2262 = vsel %vm716, %v2255, %v2257
  %v2263 = vsel %vm716, %v2257, %v2259
  %2268 = vmatprep.subr.bf16.mxu0 %v2041
  %2269 = vmatpush1.bf16.msra.mxu0 %v2040
  %2270 = vmatprep.subr.bf16.mxu0 %v2043
  %2271 = vmatpush1.bf16.msra.mxu0 %v2042
  %2272 = vmatprep.subr.bf16.mxu0 %v2091
  %2273 = vmatpush1.bf16.msra.mxu0 %v2090
  %2274 = vmatprep.subr.bf16.mxu0 %v2093
  %2275 = vmatpush1.bf16.msra.mxu0 %v2092
  %2276 = vmatprep.subr.bf16.mxu0 %v2117
  %2277 = vmatpush1.bf16.msra.mxu0 %v2116
  %2278 = vmatprep.subr.bf16.mxu0 %v2119
  %2279 = vmatpush1.bf16.msra.mxu0 %v2118
  %2280 = vmatprep.subr.bf16.mxu0 %v2143
  %2281 = vmatpush1.bf16.msra.mxu0 %v2142
  %2282 = vmatprep.subr.bf16.mxu0 %v2145
  %2283 = vmatpush1.bf16.msra.mxu0 %v2144
  %2284 = vmatprep.subr.bf16.mxu0 %v2163
  %2285 = vmatpush1.bf16.msra.mxu0 %v2162
  %2286 = vmatprep.subr.bf16.mxu0 %v2165
  %2287 = vmatpush1.bf16.msra.mxu0 %v2164
  %2288 = vmatprep.subr.bf16.mxu0 %v2189
  %2289 = vmatpush1.bf16.msra.mxu0 %v2188
  %2290 = vmatprep.subr.bf16.mxu0 %v2191
  %2291 = vmatpush1.bf16.msra.mxu0 %v2190
  %2292 = vmatprep.subr.bf16.mxu0 %v2215
  %2293 = vmatpush1.bf16.msra.mxu0 %v2214
  %2294 = vmatprep.subr.bf16.mxu0 %v2217
  %2295 = vmatpush1.bf16.msra.mxu0 %v2216
  %2296 = vmatprep.subr.bf16.mxu0 %v2235
  %2297 = vmatpush1.bf16.msra.mxu0 %v2234
  %2298 = vmatprep.subr.bf16.mxu0 %v2237
  %2299 = vmatpush1.bf16.msra.mxu0 %v2236
  %2300 = vmatprep.mubr.bf16.mxu0 %v746
  %2301 = vmatmul.mubr.bf16.gmra.mrb[0].mxu0 %v745
  %v2302 = vpop.f32.mrb[0].mxu0
  %v2303 = vadd.f32 0.0, %v2302
  %v2304 = vpop.f32.mrb[0].mxu0
  %v2305 = vadd.f32 0.0, %v2304
  %v2306 = vpop.f32.mrb[0].mxu0
  %v2307 = vadd.f32 0.0, %v2306
  %v2308 = vpop.f32.mrb[0].mxu0
  %v2309 = vadd.f32 0.0, %v2308
  %2310 = vmatprep.mubr.bf16.mxu0 %v749
  %2311 = vmatmul.mubr.bf16.gmra.mrb[0].mxu0 %v748
  %v2312 = vpop.f32.mrb[0].mxu0
  %v2313 = vadd.f32 0.0, %v2312
  %v2314 = vpop.f32.mrb[0].mxu0
  %v2315 = vadd.f32 0.0, %v2314
  %v2316 = vpop.f32.mrb[0].mxu0
  %v2317 = vadd.f32 0.0, %v2316
  %v2318 = vpop.f32.mrb[0].mxu0
  %v2319 = vadd.f32 0.0, %v2318
  %2320 = vdwg.mxu0
  %2321 = vmatprep.subr.bf16.mxu0 %v2261
  %2322 = vmatpush1.bf16.msra.mxu0 %v2260
  %2323 = vmatprep.subr.bf16.mxu0 %v2263
  %2324 = vmatpush1.bf16.msra.mxu0 %v2262
  %2325 = vmatprep.subr.bf16.mxu0 0
  %2326 = vmatpush1.bf16.msra.mxu0 0
  %2327 = vmatprep.subr.bf16.mxu0 0
  %2328 = vmatpush1.bf16.msra.mxu0 0
  %2329 = vmatprep.subr.bf16.mxu0 0
  %2330 = vmatpush1.bf16.msra.mxu0 0
  %2331 = vmatprep.subr.bf16.mxu0 0
  %2332 = vmatpush1.bf16.msra.mxu0 0
  %2333 = vmatprep.subr.bf16.mxu0 0
  %2334 = vmatpush1.bf16.msra.mxu0 0
  %2335 = vmatprep.subr.bf16.mxu0 0
  %2336 = vmatpush1.bf16.msra.mxu0 0
  %2337 = vmatprep.subr.bf16.mxu0 0
  %2338 = vmatpush1.bf16.msra.mxu0 0
  %2339 = vmatprep.subr.bf16.mxu0 0
  %2340 = vmatpush1.bf16.msra.mxu0 0
  %2341 = vmatprep.subr.bf16.mxu0 0
  %2342 = vmatpush1.bf16.msra.mxu0 0
  %2343 = vmatprep.subr.bf16.mxu0 0
  %2344 = vmatpush1.bf16.msra.mxu0 0
  %2345 = vmatprep.subr.bf16.mxu0 0
  %2346 = vmatpush1.bf16.msra.mxu0 0
  %2347 = vmatprep.subr.bf16.mxu0 0
  %2348 = vmatpush1.bf16.msra.mxu0 0
  %2349 = vmatprep.subr.bf16.mxu0 0
  %2350 = vmatpush1.bf16.msra.mxu0 0
  %2351 = vmatprep.subr.bf16.mxu0 0
  %2352 = vmatpush1.bf16.msra.mxu0 0
  %2353 = vmatprep.mubr.bf16.mxu0 0
  %2354 = vmatmul.mubr.bf16.gmra.mrb[0].mxu0 %v757
  %v2355 = vpop.f32.mrb[0].mxu0
  %v2356 = vadd.f32 %v2303, %v2355
  %v2357 = vpop.f32.mrb[0].mxu0
  %v2358 = vadd.f32 %v2305, %v2357
  %v2359 = vpop.f32.mrb[0].mxu0
  %v2360 = vadd.f32 %v2307, %v2359
  %v2361 = vpop.f32.mrb[0].mxu0
  %v2362 = vadd.f32 %v2309, %v2361
  %2363 = vmatprep.mubr.bf16.mxu0 0
  %2364 = vmatmul.mubr.bf16.gmra.mrb[0].mxu0 %v760
  %v2365 = vpop.f32.mrb[0].mxu0
  %v2366 = vadd.f32 %v2313, %v2365
  %v2367 = vpop.f32.mrb[0].mxu0
  %v2368 = vadd.f32 %v2315, %v2367
  %v2369 = vpop.f32.mrb[0].mxu0
  %v2370 = vadd.f32 %v2317, %v2369
  %v2371 = vpop.f32.mrb[0].mxu0
  %v2372 = vadd.f32 %v2319, %v2371
  %2373 = vdwg.mxu0
  %v2374 = vmul.f32 %v2356, %v871
  %v2375 = vmul.f32 %v2358, %v871
  %v2376 = vmul.f32 %v2360, %v876
  %v2377 = vmul.f32 %v2362, %v876
  %v2378 = vmul.f32 %v2366, %v881
  %v2379 = vmul.f32 %v2368, %v881
  %v2380 = vmul.f32 %v2370, %v886
  %v2381 = vmul.f32 %v2372, %v886
  %v2382 = vadd.f32 %v2374, %v899
  %v2383 = vadd.f32 %v2375, %v899
  %v2384 = vadd.f32 %v2376, %v904
  %v2385 = vadd.f32 %v2377, %v904
  %v2386 = vadd.f32 %v2378, %v909
  %v2387 = vadd.f32 %v2379, %v909
  %v2388 = vadd.f32 %v2380, %v914
  %v2389 = vadd.f32 %v2381, %v914
  %v2390 = vmax.f32 %v2382, 0.0
  %v2391 = vmax.f32 %v2383, 0.0
  %v2392 = vmax.f32 %v2384, 0.0
  %v2393 = vmax.f32 %v2385, 0.0
  %v2394 = vmax.f32 %v2386, 0.0
  %v2395 = vmax.f32 %v2387, 0.0
  %v2396 = vmax.f32 %v2388, 0.0
  %v2397 = vmax.f32 %v2389, 0.0
  %v2398 = vpack.c.bf16 %v2392, %v2390
  %v2399 = vpack.c.bf16 %v2393, %v2391
  %v2400 = vpack.c.bf16 %v2396, %v2394
  %v2401 = vpack.c.bf16 %v2397, %v2395
  %2402 = vmatprep.subr.bf16.mxu0 0
  %2403 = vmatpush1.bf16.msra.mxu0 %v1000
  %2404 = vmatprep.subr.bf16.mxu0 0
  %2405 = vmatpush1.bf16.msra.mxu0 %v1001
  %2406 = vmatprep.subr.bf16.mxu0 0
  %2407 = vmatpush1.bf16.msra.mxu0 %v1002
  %2408 = vmatprep.subr.bf16.mxu0 0
  %2409 = vmatpush1.bf16.msra.mxu0 %v1003
  %2410 = vmatprep.subr.bf16.mxu0 0
  %2411 = vmatpush1.bf16.msra.mxu0 %v1004
  %2412 = vmatprep.subr.bf16.mxu0 0
  %2413 = vmatpush1.bf16.msra.mxu0 %v1005
  %2414 = vmatprep.subr.bf16.mxu0 0
  %2415 = vmatpush1.bf16.msra.mxu0 %v1006
  %2416 = vmatprep.subr.bf16.mxu0 0
  %2417 = vmatpush1.bf16.msra.mxu0 %v1007
  %2418 = vmatprep.subr.bf16.mxu0 0
  %2419 = vmatpush1.bf16.msra.mxu0 %v1008
  %2420 = vmatprep.subr.bf16.mxu0 0
  %2421 = vmatpush1.bf16.msra.mxu0 %v1009
  %2422 = vmatprep.subr.bf16.mxu0 0
  %2423 = vmatpush1.bf16.msra.mxu0 %v1010
  %2424 = vmatprep.subr.bf16.mxu0 0
  %2425 = vmatpush1.bf16.msra.mxu0 %v1011
  %2426 = vmatprep.subr.bf16.mxu0 0
  %2427 = vmatpush1.bf16.msra.mxu0 %v1012
  %2428 = vmatprep.subr.bf16.mxu0 0
  %2429 = vmatpush1.bf16.msra.mxu0 %v1013
  %2430 = vmatprep.subr.bf16.mxu0 0
  %2431 = vmatpush1.bf16.msra.mxu0 %v1014
  %2432 = vmatprep.subr.bf16.mxu0 0
  %2433 = vmatpush1.bf16.msra.mxu0 %v1015
  %2434 = vmatprep.mubr.bf16.mxu0 %v2399
  %2435 = vmatmul.mubr.bf16.gmra.mrb[0].mxu0 %v2398
  %v2436 = vpop.f32.mrb[0].mxu0
  %v2437 = vadd.f32 0.0, %v2436
  %v2438 = vpop.f32.mrb[0].mxu0
  %v2439 = vpop.f32.mrb[0].mxu0
  %v2440 = vadd.f32 0.0, %v2439
  %v2441 = vpop.f32.mrb[0].mxu0
  %2442 = vmatprep.mubr.bf16.mxu0 %v2401
  %2443 = vmatmul.mubr.bf16.gmra.mrb[0].mxu0 %v2400
  %v2444 = vpop.f32.mrb[0].mxu0
  %v2445 = vadd.f32 0.0, %v2444
  %v2446 = vpop.f32.mrb[0].mxu0
  %v2447 = vpop.f32.mrb[0].mxu0
  %v2448 = vadd.f32 0.0, %v2447
  %v2449 = vpop.f32.mrb[0].mxu0
  %2450 = vdwg.mxu0
  %v2451 = vpack.c.bf16 %v2440, %v2437
  %v2452 = vpack.c.bf16 %v2448, %v2445
  %2453 = vmatprep.subr.bf16.mxu0 0
  %2454 = vmatpush1.bf16.msra.mxu0 %v2451
  %2455 = vmatprep.subr.bf16.mxu0 0
  %2456 = vmatpush1.bf16.msra.mxu0 %v2452
  %2457 = vmatprep.subr.bf16.mxu0 0
  %2458 = vmatpush1.bf16.msra.mxu0 0
  %2459 = vmatprep.subr.bf16.mxu0 0
  %2460 = vmatpush1.bf16.msra.mxu0 0
  %2461 = vmatprep.subr.bf16.mxu0 0
  %2462 = vmatpush1.bf16.msra.mxu0 0
  %2463 = vmatprep.subr.bf16.mxu0 0
  %2464 = vmatpush1.bf16.msra.mxu0 0
  %2465 = vmatprep.subr.bf16.mxu0 0
  %2466 = vmatpush1.bf16.msra.mxu0 0
  %2467 = vmatprep.subr.bf16.mxu0 0
  %2468 = vmatpush1.bf16.msra.mxu0 0
  %2469 = vmatprep.subr.bf16.mxu0 0
  %2470 = vmatpush1.bf16.msra.mxu0 0
  %2471 = vmatprep.subr.bf16.mxu0 0
  %2472 = vmatpush1.bf16.msra.mxu0 0
  %2473 = vmatprep.subr.bf16.mxu0 0
  %2474 = vmatpush1.bf16.msra.mxu0 0
  %2475 = vmatprep.subr.bf16.mxu0 0
  %2476 = vmatpush1.bf16.msra.mxu0 0
  %2477 = vmatprep.subr.bf16.mxu0 0
  %2478 = vmatpush1.bf16.msra.mxu0 0
  %2479 = vmatprep.subr.bf16.mxu0 0
  %2480 = vmatpush1.bf16.msra.mxu0 0
  %2481 = vmatprep.subr.bf16.mxu0 0
  %2482 = vmatpush1.bf16.msra.mxu0 0
  %2483 = vmatprep.subr.bf16.mxu0 0
  %2484 = vmatpush1.bf16.msra.mxu0 0
  %2485 = vmatprep.mubr.bf16.mxu0 0
  %2486 = vmatmul.mubr.bf16.gmra.mrb[0].mxu0 %v1124
  %v2487 = vpop.f32.mrb[0].mxu0
  %v2488 = vadd.f32 0.0, %v2487
  %v2489 = vpop.f32.mrb[0].mxu0
  %v2490 = vpop.f32.mrb[0].mxu0
  %v2491 = vadd.f32 0.0, %v2490
  %v2492 = vpop.f32.mrb[0].mxu0
  %2493 = vmatprep.mubr.bf16.mxu0 0
  %2494 = vmatmul.mubr.bf16.gmra.mrb[0].mxu0 %v1127
  %v2495 = vpop.f32.mrb[0].mxu0
  %v2496 = vadd.f32 0.0, %v2495
  %v2497 = vpop.f32.mrb[0].mxu0
  %v2498 = vpop.f32.mrb[0].mxu0
  %v2499 = vadd.f32 0.0, %v2498
  %v2500 = vpop.f32.mrb[0].mxu0
  %2501 = vmatprep.mubr.bf16.mxu0 0
  %2502 = vmatmul.mubr.bf16.gmra.mrb[0].mxu0 %v1130
  %v2503 = vpop.f32.mrb[0].mxu0
  %v2504 = vadd.f32 0.0, %v2503
  %v2505 = vpop.f32.mrb[0].mxu0
  %v2506 = vpop.f32.mrb[0].mxu0
  %v2507 = vadd.f32 0.0, %v2506
  %v2508 = vpop.f32.mrb[0].mxu0
  %2509 = vmatprep.mubr.bf16.mxu0 0
  %2510 = vmatmul.mubr.bf16.gmra.mrb[0].mxu0 %v1133
  %v2511 = vpop.f32.mrb[0].mxu0
  %v2512 = vadd.f32 0.0, %v2511
  %v2513 = vpop.f32.mrb[0].mxu0
  %v2514 = vpop.f32.mrb[0].mxu0
  %v2515 = vadd.f32 0.0, %v2514
  %v2516 = vpop.f32.mrb[0].mxu0
  %2517 = vmatprep.mubr.bf16.mxu0 0
  %2518 = vmatmul.mubr.bf16.gmra.mrb[0].mxu0 %v1136
  %v2519 = vpop.f32.mrb[0].mxu0
  %v2520 = vadd.f32 0.0, %v2519
  %v2521 = vpop.f32.mrb[0].mxu0
  %v2522 = vpop.f32.mrb[0].mxu0
  %v2523 = vadd.f32 0.0, %v2522
  %v2524 = vpop.f32.mrb[0].mxu0
  %2525 = vmatprep.mubr.bf16.mxu0 0
  %2526 = vmatmul.mubr.bf16.gmra.mrb[0].mxu0 %v1139
  %v2527 = vpop.f32.mrb[0].mxu0
  %v2528 = vadd.f32 0.0, %v2527
  %v2529 = vpop.f32.mrb[0].mxu0
  %v2530 = vpop.f32.mrb[0].mxu0
  %v2531 = vadd.f32 0.0, %v2530
  %v2532 = vpop.f32.mrb[0].mxu0
  %2533 = vmatprep.mubr.bf16.mxu0 0
  %2534 = vmatmul.mubr.bf16.gmra.mrb[0].mxu0 %v1142
  %v2535 = vpop.f32.mrb[0].mxu0
  %v2536 = vadd.f32 0.0, %v2535
  %v2537 = vpop.f32.mrb[0].mxu0
  %v2538 = vpop.f32.mrb[0].mxu0
  %v2539 = vadd.f32 0.0, %v2538
  %v2540 = vpop.f32.mrb[0].mxu0
  %2541 = vmatprep.mubr.bf16.mxu0 0
  %2542 = vmatmul.mubr.bf16.gmra.mrb[0].mxu0 %v1145
  %v2543 = vpop.f32.mrb[0].mxu0
  %v2544 = vadd.f32 0.0, %v2543
  %v2545 = vpop.f32.mrb[0].mxu0
  %v2546 = vpop.f32.mrb[0].mxu0
  %v2547 = vadd.f32 0.0, %v2546
  %v2548 = vpop.f32.mrb[0].mxu0
  %2549 = vdwg.mxu0
  %v2550 = vmul.f32 %v2488, %v1247
  %v2551 = vmul.f32 %v2491, %v1252
  %v2552 = vmul.f32 %v2496, %v1257
  %v2553 = vmul.f32 %v2499, %v1262
  %v2554 = vmul.f32 %v2504, %v1267
  %v2555 = vmul.f32 %v2507, %v1272
  %v2556 = vmul.f32 %v2512, %v1277
  %v2557 = vmul.f32 %v2515, %v1282
  %v2558 = vmul.f32 %v2520, %v1287
  %v2559 = vmul.f32 %v2523, %v1292
  %v2560 = vmul.f32 %v2528, %v1297
  %v2561 = vmul.f32 %v2531, %v1302
  %v2562 = vmul.f32 %v2536, %v1307
  %v2563 = vmul.f32 %v2539, %v1312
  %v2564 = vmul.f32 %v2544, %v1317
  %v2565 = vmul.f32 %v2547, %v1322
  %v2566 = vadd.f32 %v2550, %v1343
  %v2567 = vadd.f32 %v2551, %v1348
  %v2568 = vadd.f32 %v2552, %v1353
  %v2569 = vadd.f32 %v2553, %v1358
  %v2570 = vadd.f32 %v2554, %v1363
  %v2571 = vadd.f32 %v2555, %v1368
  %v2572 = vadd.f32 %v2556, %v1373
  %v2573 = vadd.f32 %v2557, %v1378
  %v2574 = vadd.f32 %v2558, %v1383
  %v2575 = vadd.f32 %v2559, %v1388
  %v2576 = vadd.f32 %v2560, %v1393
  %v2577 = vadd.f32 %v2561, %v1398
  %v2578 = vadd.f32 %v2562, %v1403
  %v2579 = vadd.f32 %v2563, %v1408
  %v2580 = vadd.f32 %v2564, %v1413
  %v2581 = vadd.f32 %v2565, %v1418
  %2582 = vmatprep.subr.bf16.mxu0 0
  %2583 = vmatpush1.bf16.msra.mxu0 %v1000
  %2584 = vmatprep.subr.bf16.mxu0 0
  %2585 = vmatpush1.bf16.msra.mxu0 %v1001
  %2586 = vmatprep.subr.bf16.mxu0 0
  %2587 = vmatpush1.bf16.msra.mxu0 %v1002
  %2588 = vmatprep.subr.bf16.mxu0 0
  %2589 = vmatpush1.bf16.msra.mxu0 %v1003
  %2590 = vmatprep.subr.bf16.mxu0 0
  %2591 = vmatpush1.bf16.msra.mxu0 %v1004
  %2592 = vmatprep.subr.bf16.mxu0 0
  %2593 = vmatpush1.bf16.msra.mxu0 %v1005
  %2594 = vmatprep.subr.bf16.mxu0 0
  %2595 = vmatpush1.bf16.msra.mxu0 %v1006
  %2596 = vmatprep.subr.bf16.mxu0 0
  %2597 = vmatpush1.bf16.msra.mxu0 %v1007
  %2598 = vmatprep.subr.bf16.mxu0 0
  %2599 = vmatpush1.bf16.msra.mxu0 %v1008
  %2600 = vmatprep.subr.bf16.mxu0 0
  %2601 = vmatpush1.bf16.msra.mxu0 %v1009
  %2602 = vmatprep.subr.bf16.mxu0 0
  %2603 = vmatpush1.bf16.msra.mxu0 %v1010
  %2604 = vmatprep.subr.bf16.mxu0 0
  %2605 = vmatpush1.bf16.msra.mxu0 %v1011
  %2606 = vmatprep.subr.bf16.mxu0 0
  %2607 = vmatpush1.bf16.msra.mxu0 %v1012
  %2608 = vmatprep.subr.bf16.mxu0 0
  %2609 = vmatpush1.bf16.msra.mxu0 %v1013
  %2610 = vmatprep.subr.bf16.mxu0 0
  %2611 = vmatpush1.bf16.msra.mxu0 %v1014
  %2612 = vmatprep.subr.bf16.mxu0 0
  %2613 = vmatpush1.bf16.msra.mxu0 %v1015
  %2614 = vmatprep.mubr.bf16.mxu0 %v1924
  %2615 = vmatmul.mubr.bf16.gmra.mrb[0].mxu0 %v1923
  %v2616 = vpop.f32.mrb[0].mxu0
  %v2617 = vadd.f32 0.0, %v2616
  %v2618 = vpop.f32.mrb[0].mxu0
  %v2619 = vpop.f32.mrb[0].mxu0
  %v2620 = vadd.f32 0.0, %v2619
  %v2621 = vpop.f32.mrb[0].mxu0
  %2622 = vmatprep.mubr.bf16.mxu0 %v1926
  %2623 = vmatmul.mubr.bf16.gmra.mrb[0].mxu0 %v1925
  %v2624 = vpop.f32.mrb[0].mxu0
  %v2625 = vadd.f32 0.0, %v2624
  %v2626 = vpop.f32.mrb[0].mxu0
  %v2627 = vpop.f32.mrb[0].mxu0
  %v2628 = vadd.f32 0.0, %v2627
  %v2629 = vpop.f32.mrb[0].mxu0
  %2630 = vmatprep.mubr.bf16.mxu0 %v1928
  %2631 = vmatmul.mubr.bf16.gmra.mrb[0].mxu0 %v1927
  %v2632 = vpop.f32.mrb[0].mxu0
  %v2633 = vadd.f32 0.0, %v2632
  %v2634 = vpop.f32.mrb[0].mxu0
  %v2635 = vpop.f32.mrb[0].mxu0
  %v2636 = vadd.f32 0.0, %v2635
  %v2637 = vpop.f32.mrb[0].mxu0
  %2638 = vmatprep.mubr.bf16.mxu0 %v1930
  %2639 = vmatmul.mubr.bf16.gmra.mrb[0].mxu0 %v1929
  %v2640 = vpop.f32.mrb[0].mxu0
  %v2641 = vadd.f32 0.0, %v2640
  %v2642 = vpop.f32.mrb[0].mxu0
  %v2643 = vpop.f32.mrb[0].mxu0
  %v2644 = vadd.f32 0.0, %v2643
  %v2645 = vpop.f32.mrb[0].mxu0
  %2646 = vdwg.mxu0
  %v2647 = vpack.c.bf16 %v2620, %v2617
  %v2648 = vpack.c.bf16 %v2628, %v2625
  %v2649 = vpack.c.bf16 %v2636, %v2633
  %v2650 = vpack.c.bf16 %v2644, %v2641
  %2651 = vmatprep.subr.bf16.mxu0 0
  %2652 = vmatpush1.bf16.msra.mxu0 %v2647
  %2653 = vmatprep.subr.bf16.mxu0 0
  %2654 = vmatpush1.bf16.msra.mxu0 %v2648
  %2655 = vmatprep.subr.bf16.mxu0 0
  %2656 = vmatpush1.bf16.msra.mxu0 %v2649
  %2657 = vmatprep.subr.bf16.mxu0 0
  %2658 = vmatpush1.bf16.msra.mxu0 %v2650
  %2659 = vmatprep.subr.bf16.mxu0 0
  %2660 = vmatpush1.bf16.msra.mxu0 0
  %2661 = vmatprep.subr.bf16.mxu0 0
  %2662 = vmatpush1.bf16.msra.mxu0 0
  %2663 = vmatprep.subr.bf16.mxu0 0
  %2664 = vmatpush1.bf16.msra.mxu0 0
  %2665 = vmatprep.subr.bf16.mxu0 0
  %2666 = vmatpush1.bf16.msra.mxu0 0
  %2667 = vmatprep.subr.bf16.mxu0 0
  %2668 = vmatpush1.bf16.msra.mxu0 0
  %2669 = vmatprep.subr.bf16.mxu0 0
  %2670 = vmatpush1.bf16.msra.mxu0 0
  %2671 = vmatprep.subr.bf16.mxu0 0
  %2672 = vmatpush1.bf16.msra.mxu0 0
  %2673 = vmatprep.subr.bf16.mxu0 0
  %2674 = vmatpush1.bf16.msra.mxu0 0
  %2675 = vmatprep.subr.bf16.mxu0 0
  %2676 = vmatpush1.bf16.msra.mxu0 0
  %2677 = vmatprep.subr.bf16.mxu0 0
  %2678 = vmatpush1.bf16.msra.mxu0 0
  %2679 = vmatprep.subr.bf16.mxu0 0
  %2680 = vmatpush1.bf16.msra.mxu0 0
  %2681 = vmatprep.subr.bf16.mxu0 0
  %2682 = vmatpush1.bf16.msra.mxu0 0
  %2683 = vmatprep.mubr.bf16.mxu0 0
  %2684 = vmatmul.mubr.bf16.gmra.mrb[0].mxu0 %v1546
  %v2685 = vpop.f32.mrb[0].mxu0
  %v2686 = vadd.f32 0.0, %v2685
  %v2687 = vpop.f32.mrb[0].mxu0
  %v2688 = vpop.f32.mrb[0].mxu0
  %v2689 = vadd.f32 0.0, %v2688
  %v2690 = vpop.f32.mrb[0].mxu0
  %2691 = vmatprep.mubr.bf16.mxu0 0
  %2692 = vmatmul.mubr.bf16.gmra.mrb[0].mxu0 %v1549
  %v2693 = vpop.f32.mrb[0].mxu0
  %v2694 = vadd.f32 0.0, %v2693
  %v2695 = vpop.f32.mrb[0].mxu0
  %v2696 = vpop.f32.mrb[0].mxu0
  %v2697 = vadd.f32 0.0, %v2696
  %v2698 = vpop.f32.mrb[0].mxu0
  %2699 = vmatprep.mubr.bf16.mxu0 0
  %2700 = vmatmul.mubr.bf16.gmra.mrb[0].mxu0 %v1552
  %v2701 = vpop.f32.mrb[0].mxu0
  %v2702 = vadd.f32 0.0, %v2701
  %v2703 = vpop.f32.mrb[0].mxu0
  %v2704 = vpop.f32.mrb[0].mxu0
  %v2705 = vadd.f32 0.0, %v2704
  %v2706 = vpop.f32.mrb[0].mxu0
  %2707 = vmatprep.mubr.bf16.mxu0 0
  %2708 = vmatmul.mubr.bf16.gmra.mrb[0].mxu0 %v1555
  %v2709 = vpop.f32.mrb[0].mxu0
  %v2710 = vadd.f32 0.0, %v2709
  %v2711 = vpop.f32.mrb[0].mxu0
  %v2712 = vpop.f32.mrb[0].mxu0
  %v2713 = vadd.f32 0.0, %v2712
  %v2714 = vpop.f32.mrb[0].mxu0
  %2715 = vmatprep.mubr.bf16.mxu0 0
  %2716 = vmatmul.mubr.bf16.gmra.mrb[0].mxu0 %v1558
  %v2717 = vpop.f32.mrb[0].mxu0
  %v2718 = vadd.f32 0.0, %v2717
  %v2719 = vpop.f32.mrb[0].mxu0
  %v2720 = vpop.f32.mrb[0].mxu0
  %v2721 = vadd.f32 0.0, %v2720
  %v2722 = vpop.f32.mrb[0].mxu0
  %2723 = vmatprep.mubr.bf16.mxu0 0
  %2724 = vmatmul.mubr.bf16.gmra.mrb[0].mxu0 %v1561
  %v2725 = vpop.f32.mrb[0].mxu0
  %v2726 = vadd.f32 0.0, %v2725
  %v2727 = vpop.f32.mrb[0].mxu0
  %v2728 = vpop.f32.mrb[0].mxu0
  %v2729 = vadd.f32 0.0, %v2728
  %v2730 = vpop.f32.mrb[0].mxu0
  %2731 = vmatprep.mubr.bf16.mxu0 0
  %2732 = vmatmul.mubr.bf16.gmra.mrb[0].mxu0 %v1564
  %v2733 = vpop.f32.mrb[0].mxu0
  %v2734 = vadd.f32 0.0, %v2733
  %v2735 = vpop.f32.mrb[0].mxu0
  %v2736 = vpop.f32.mrb[0].mxu0
  %v2737 = vadd.f32 0.0, %v2736
  %v2738 = vpop.f32.mrb[0].mxu0
  %2739 = vmatprep.mubr.bf16.mxu0 0
  %2740 = vmatmul.mubr.bf16.gmra.mrb[0].mxu0 %v1567
  %v2741 = vpop.f32.mrb[0].mxu0
  %v2742 = vadd.f32 0.0, %v2741
  %v2743 = vpop.f32.mrb[0].mxu0
  %v2744 = vpop.f32.mrb[0].mxu0
  %v2745 = vadd.f32 0.0, %v2744
  %v2746 = vpop.f32.mrb[0].mxu0
  %2747 = vdwg.mxu0
  %v2748 = vmul.f32 %v2686, %v1669
  %v2749 = vmul.f32 %v2689, %v1674
  %v2750 = vmul.f32 %v2694, %v1679
  %v2751 = vmul.f32 %v2697, %v1684
  %v2752 = vmul.f32 %v2702, %v1689
  %v2753 = vmul.f32 %v2705, %v1694
  %v2754 = vmul.f32 %v2710, %v1699
  %v2755 = vmul.f32 %v2713, %v1704
  %v2756 = vmul.f32 %v2718, %v1709
  %v2757 = vmul.f32 %v2721, %v1714
  %v2758 = vmul.f32 %v2726, %v1719
  %v2759 = vmul.f32 %v2729, %v1724
  %v2760 = vmul.f32 %v2734, %v1729
  %v2761 = vmul.f32 %v2737, %v1734
  %v2762 = vmul.f32 %v2742, %v1739
  %v2763 = vmul.f32 %v2745, %v1744
  %v2764 = vadd.f32 %v2748, %v1765
  %v2765 = vadd.f32 %v2749, %v1770
  %v2766 = vadd.f32 %v2750, %v1775
  %v2767 = vadd.f32 %v2751, %v1780
  %v2768 = vadd.f32 %v2752, %v1785
  %v2769 = vadd.f32 %v2753, %v1790
  %v2770 = vadd.f32 %v2754, %v1795
  %v2771 = vadd.f32 %v2755, %v1800
  %v2772 = vadd.f32 %v2756, %v1805
  %v2773 = vadd.f32 %v2757, %v1810
  %v2774 = vadd.f32 %v2758, %v1815
  %v2775 = vadd.f32 %v2759, %v1820
  %v2776 = vadd.f32 %v2760, %v1825
  %v2777 = vadd.f32 %v2761, %v1830
  %v2778 = vadd.f32 %v2762, %v1835
  %v2779 = vadd.f32 %v2763, %v1840
  %v2780 = vadd.f32 %v2566, %v2764
  %v2781 = vadd.f32 %v2567, %v2765
  %v2782 = vadd.f32 %v2568, %v2766
  %v2783 = vadd.f32 %v2569, %v2767
  %v2784 = vadd.f32 %v2570, %v2768
  %v2785 = vadd.f32 %v2571, %v2769
  %v2786 = vadd.f32 %v2572, %v2770
  %v2787 = vadd.f32 %v2573, %v2771
  %v2788 = vadd.f32 %v2574, %v2772
  %v2789 = vadd.f32 %v2575, %v2773
  %v2790 = vadd.f32 %v2576, %v2774
  %v2791 = vadd.f32 %v2577, %v2775
  %v2792 = vadd.f32 %v2578, %v2776
  %v2793 = vadd.f32 %v2579, %v2777
  %v2794 = vadd.f32 %v2580, %v2778
  %v2795 = vadd.f32 %v2581, %v2779
  %v2796 = vmax.f32 %v2780, 0.0
  %v2797 = vmax.f32 %v2781, 0.0
  %v2798 = vmax.f32 %v2782, 0.0
  %v2799 = vmax.f32 %v2783, 0.0
  %v2800 = vmax.f32 %v2784, 0.0
  %v2801 = vmax.f32 %v2785, 0.0
  %v2802 = vmax.f32 %v2786, 0.0
  %v2803 = vmax.f32 %v2787, 0.0
  %v2804 = vmax.f32 %v2788, 0.0
  %v2805 = vmax.f32 %v2789, 0.0
  %v2806 = vmax.f32 %v2790, 0.0
  %v2807 = vmax.f32 %v2791, 0.0
  %v2808 = vmax.f32 %v2792, 0.0
  %v2809 = vmax.f32 %v2793, 0.0
  %v2810 = vmax.f32 %v2794, 0.0
  %v2811 = vmax.f32 %v2795, 0.0
  %s2812 = scalar_lea.vmem %s14, 128
  %2813 = vst.msk [vmem:[%s2812] sm:$0xff] %vm281, %v2796
  %2814 = vst.msk [vmem:[%s2812 + $0x8] sm:$0xff] %vm281, %v2797
  %2815 = vst.msk [vmem:[%s2812 + $0x10] sm:$0xff] %vm281, %v2798
  %2816 = vst.msk [vmem:[%s2812 + $0x18] sm:$0xff] %vm281, %v2799
  %2817 = vst.msk [vmem:[%s2812 + $0x20] sm:$0xff] %vm281, %v2800
  %2818 = vst.msk [vmem:[%s2812 + $0x28] sm:$0xff] %vm281, %v2801
  %2819 = vst.msk [vmem:[%s2812 + $0x30] sm:$0xff] %vm281, %v2802
  %2820 = vst.msk [vmem:[%s2812 + $0x38] sm:$0xff] %vm281, %v2803
  %2821 = vst.msk [vmem:[%s2812 + $0x40] sm:$0xff] %vm281, %v2804
  %2822 = vst.msk [vmem:[%s2812 + $0x48] sm:$0xff] %vm281, %v2805
  %2823 = vst.msk [vmem:[%s2812 + $0x50] sm:$0xff] %vm281, %v2806
  %2824 = vst.msk [vmem:[%s2812 + $0x58] sm:$0xff] %vm281, %v2807
  %2825 = vst.msk [vmem:[%s2812 + $0x60] sm:$0xff] %vm281, %v2808
  %2826 = vst.msk [vmem:[%s2812 + $0x68] sm:$0xff] %vm281, %v2809
  %2827 = vst.msk [vmem:[%s2812 + $0x70] sm:$0xff] %vm281, %v2810
  %2828 = vst.msk [vmem:[%s2812 + $0x78] sm:$0xff] %vm281, %v2811
  // Predicated region
  $region58: #{tpu_custom_call.1} parent=0 // pred_check
    _
  $region59: #{tpu_custom_call.1} parent=0 // pred_check_branch
    %2830 = sbr.rel (0) target = $region61
  $region60: #{tpu_custom_call.1} parent=0 // pred_region
    _
  $region61: #{tpu_custom_call.1} parent=0 // pred_fallthru
    _
  // Predicated region
  $region62: #{tpu_custom_call.1} parent=0 // pred_check
    _
  $region63: #{tpu_custom_call.1} parent=0 // pred_check_branch
    %2832 = sbr.rel (0) target = $region65
  $region64: #{tpu_custom_call.1} parent=0 // pred_region
    _
  $region65: #{tpu_custom_call.1} parent=0 // pred_fallthru
    _

</llo_original>
